<compile_context>
chip_gen: v5e
topology: v5e:2x2
jax: 0.10.0
libtpu: 0.0.40
codegen_flags: <defaults>
</compile_context>

<pallas_src>
import functools

import jax
import jax.numpy as jnp
from jax.experimental import pallas as pl
from jax.experimental.pallas import tpu as pltpu


# ------------------------------ helpers --------------------------------------
def _round_up(x, m):
    return ((x + m - 1) // m) * m


def _leaky(v, slope):
    # torch.nn.LeakyReLU default negative_slope = 0.01
    return jnp.where(v >= 0.0, v, slope * v)


def _vmem_capacity_bytes():
    """Physical VMEM of the attached TPU generation (fallback: v7x's 64 MiB)."""
    try:
        return int(pltpu.get_tpu_info().vmem_capacity_bytes)
    except Exception:
        return 64 * 1024 * 1024


def _plan_final_tiles(n, k, w_itemsize):
    """Column tile for the streamed final-layer weight.

    Generation-aware: budget ~1/10 of physical VMEM per weight tile (the int8
    tile is double-buffered and a bf16 dequant copy exists in-kernel), then
    pick the multiple-of-128 tile <= budget that minimizes column padding.
    Returns (tn, n_padded) with n_padded % tn == 0.
    """
    vmem_cap = _vmem_capacity_bytes()
    max_tile_bytes = max(vmem_cap // 10, 128 * k * w_itemsize)
    n128 = _round_up(n, 128)
    cap_cols = (max_tile_bytes // (k * w_itemsize)) // 128 * 128
    cap_cols = max(128, min(cap_cols, n128))
    best_tn, best_waste = 128, _round_up(n128, 128) - n128
    tn = 128
    while tn <= cap_cols:
        waste = _round_up(n128, tn) - n128
        if waste <= best_waste:          # prefer larger tn at equal padding
            best_tn, best_waste = tn, waste
        tn += 128
    return best_tn, _round_up(n128, best_tn)


# ------------------------- fused skip-MLP kernel ------------------------------
def _mlp_kernel(x_ref, w0_ref, b0_ref, ws_ref, bs_ref, wskip_ref, o_ref, *,
                slope, skip_idx, num_layers):
    """Entire skip_connection MLP, weights VMEM-resident in bf16.

    x_ref     : [Bp, Dp]  f32   zero-padded network input
    w0_ref    : [Dp, H]   bf16  lin0 weight (rows zero-padded)
    b0_ref    : [1, H]    f32
    ws_ref    : [n_sq, H, H] bf16   lin1..lin{num_layers-2} square weights
    bs_ref    : [n_sq, 1, H] f32
    wskip_ref : [Dp, H]   bf16  extra rows of the skip layer's weight
    o_ref     : [Bp, H]   f32
    """
    inp = x_ref[...].astype(jnp.bfloat16)
    h = jnp.dot(inp, w0_ref[...], preferred_element_type=jnp.float32) + b0_ref[...]
    if 0 < num_layers - 2:               # lin0 activation (always true, depth>=1)
        h = _leaky(h, slope)

    n_sq = ws_ref.shape[0]
    for l in range(1, n_sq + 1):         # layers lin1 .. lin{num_layers-2}, unrolled
        y = jnp.dot(h.astype(jnp.bfloat16), ws_ref[l - 1],
                    preferred_element_type=jnp.float32)
        if l == skip_idx:                # torch.cat([x, input]) folded into two matmuls
            y = y + jnp.dot(inp, wskip_ref[...],
                            preferred_element_type=jnp.float32)
        y = y + bs_ref[l - 1]
        if l < num_layers - 2:           # LeakyReLU on all but the last MLP layer
            y = _leaky(y, slope)
        h = y

    o_ref[...] = h.astype(o_ref.dtype)


def fused_skip_mlp(inp_p, w0, b0, ws, bs, w_skip, *, skip_idx, num_layers,
                   slope=0.01):
    Bp, Dp = inp_p.shape
    Hd = w0.shape[1]
    n_sq = ws.shape[0]
    kernel = functools.partial(_mlp_kernel, slope=slope, skip_idx=skip_idx,
                               num_layers=num_layers)
    return pl.pallas_call(
        kernel,
        out_shape=jax.ShapeDtypeStruct((Bp, Hd), jnp.float32),
        grid_spec=pltpu.PrefetchScalarGridSpec(
            num_scalar_prefetch=0,
            grid=(1,),
            in_specs=[
                pl.BlockSpec((Bp, Dp), lambda i: (0, 0)),
                pl.BlockSpec((Dp, Hd), lambda i: (0, 0)),
                pl.BlockSpec((1, Hd), lambda i: (0, 0)),
                pl.BlockSpec((n_sq, Hd, Hd), lambda i: (0, 0, 0)),
                pl.BlockSpec((n_sq, 1, Hd), lambda i: (0, 0, 0)),
                pl.BlockSpec((Dp, Hd), lambda i: (0, 0)),
            ],
            out_specs=pl.BlockSpec((Bp, Hd), lambda i: (0, 0)),
        ),
        compiler_params=pltpu.CompilerParams(
            dimension_semantics=("arbitrary",),
            vmem_limit_bytes=32 * 1024 * 1024),
    )(inp_p, w0, b0, ws, bs, w_skip)


# ---------------------------- final big linear --------------------------------
def _final_linear_kernel(x_ref, w_ref, s_ref, b_ref, o_ref):
    x = x_ref[...]                               # [B, K] bf16 (resident)
    w = w_ref[...].astype(jnp.bfloat16)          # int8 tile -> bf16 (VPU, hidden under DMA)
    y = jnp.dot(x, w, preferred_element_type=jnp.float32)
    o_ref[...] = (y * s_ref[...] + b_ref[...]).astype(o_ref.dtype)


def pallas_final_linear(x, w_q, scale, bias, *, tn):
    """y = (x @ dequant(w_q)) * scale + bias.

    x: [B, K] bf16, w_q: [K, Np] int8 (streamed), scale/bias: [1, Np] f32.
    """
    B, K = x.shape
    Kw, Np = w_q.shape
    assert K == Kw, (K, Kw)
    assert tn % 128 == 0 and Np % tn == 0, (Np, tn)

    vmem_cap = _vmem_capacity_bytes()
    vmem_limit = int(min(max(vmem_cap * 3 // 5, 16 * 1024 * 1024),
                         56 * 1024 * 1024))

    cost = pl.CostEstimate(
        flops=2 * B * K * Np,
        transcendentals=0,
        bytes_accessed=int(K * Np * 1 + B * K * 2 + 2 * Np * 4 + B * Np * 4),
    )

    return pl.pallas_call(
        _final_linear_kernel,
        out_shape=jax.ShapeDtypeStruct((B, Np), jnp.float32),
        grid_spec=pltpu.PrefetchScalarGridSpec(
            num_scalar_prefetch=0,
            grid=(Np // tn,),
            in_specs=[
                pl.BlockSpec((B, K), lambda j: (0, 0)),          # resident bf16 activations
                pl.BlockSpec((K, tn), lambda j: (0, j),
                             pipeline_mode=pl.Buffered(2)),      # int8 weight stream
                pl.BlockSpec((1, tn), lambda j: (0, j)),         # per-column dequant scale
                pl.BlockSpec((1, tn), lambda j: (0, j)),         # bias
            ],
            out_specs=pl.BlockSpec((B, tn), lambda j: (0, j)),   # real-batch rows only
        ),
        compiler_params=pltpu.CompilerParams(
            # TODO(synk): on v7x, split the N axis across the 2 TensorCores
            # (pltpu.CORE_PARALLEL / pl.core_map) for ~2x on the weight stream;
            # plain "parallel" is kept here as the portable, safe default.
            dimension_semantics=("parallel",),
            vmem_limit_bytes=vmem_limit),
        cost_estimate=cost,
    )(x, w_q, scale, bias)


# --------------------------- parameter creation --------------------------------
def _xavier(key, fan_in, fan_out):
    bound = (6.0 / (fan_in + fan_out)) ** 0.5
    # stored as [K, N] (torch weight transposed), ready for x @ w
    return jax.random.uniform(key, (fan_in, fan_out), jnp.float32,
                              minval=-bound, maxval=bound)


def init_params(key, d_in, d_hidden, depth, skip_layer, d_lin):
    assert len(skip_layer) == 1 and 1 <= skip_layer[0] <= depth
    skip_idx = int(skip_layer[0])
    num_layers = depth + 2                   # len([d_in] + [H]*depth + [H])
    d_in_pad = _round_up(d_in, 128)
    n_sq = num_layers - 2                    # square hidden layers lin1..lin{n}

    keys = jax.random.split(key, num_layers)

    # lin0: d_in -> d_hidden, rows zero-padded to d_in_pad (input zero-padded too)
    w0 = jnp.zeros((d_in_pad, d_hidden), jnp.float32).at[:d_in].set(
        _xavier(keys[0], d_in, d_hidden))
    b0 = jnp.zeros((1, d_hidden), jnp.float32)

    ws, bs = [], []
    w_skip = jnp.zeros((d_in_pad, d_hidden), jnp.float32)
    for l in range(1, num_layers - 1):
        if l == skip_idx:
            wfull = _xavier(keys[l], d_hidden + d_in, d_hidden)   # torch cat([x, input])
            ws.append(wfull[:d_hidden])                           # multiplies x
            w_skip = w_skip.at[:d_in].set(wfull[d_hidden:])       # multiplies input
        else:
            ws.append(_xavier(keys[l], d_hidden, d_hidden))
        bs.append(jnp.zeros((1, d_hidden), jnp.float32))
    ws = jnp.stack(ws)                        # [n_sq, H, H]
    bs = jnp.stack(bs)                        # [n_sq, 1, H]

    # final linear: f32 master weight, streamed as int8 + per-column f32 scale.
    w_final = _xavier(keys[-1], d_hidden, d_lin)
    b_final = jnp.zeros((d_lin,), jnp.float32)
    amax = jnp.maximum(jnp.max(jnp.abs(w_final), axis=0), 1e-8)   # [N]
    w_scale = (amax / 127.0).astype(jnp.float32)
    w_q = jnp.clip(jnp.round(w_final / w_scale), -127.0, 127.0).astype(jnp.int8)

    # pad N so the tile always divides it (no full-width fallback block).
    tn, n_pad = _plan_final_tiles(d_lin, d_hidden, 1)
    pad = n_pad - d_lin
    w_q_p = jnp.pad(w_q, ((0, 0), (0, pad)))
    scale_p = jnp.pad(w_scale, (0, pad)).reshape(1, n_pad)
    bias_p = jnp.pad(b_final, (0, pad)).reshape(1, n_pad)

    params = dict(
        w0=w0.astype(jnp.bfloat16), b0=b0,
        ws=ws.astype(jnp.bfloat16), bs=bs,
        w_skip=w_skip.astype(jnp.bfloat16),
        w_final_q=w_q_p, w_final_scale=scale_p, b_final=bias_p,
    )
    ref_params = dict(w0=w0, b0=b0, ws=ws, bs=bs, w_skip=w_skip,
                      w_final=w_final, b_final=b_final)
    cfg = dict(num_layers=num_layers, skip_idx=skip_idx,
               d_in=d_in, d_in_pad=d_in_pad, d_lin=d_lin, tn=tn, n_pad=n_pad)
    return params, ref_params, cfg


# --------------------------------- forward -------------------------------------
def dis_decoder_linear_forward(inp, params, *, H, W, num_layers, skip_idx,
                               d_in, d_in_pad, d_lin, tn, n_pad, slope=0.01,
                               **_unused):
    """Mirrors DisDecoder_linear.forward: skip-MLP, output linear, NCHW reshape."""
    # TODO(synk): optionally fuse the skip-MLP as a pl.when(first-step) prologue
    # of the final-linear kernel (saves one dispatch); kept separate so the N
    # axis of the dominant kernel stays safely shardable across cores.
    B = inp.shape[0]
    Bp = _round_up(max(B, 8), 8)              # sublane-aligned batch for the MLP
    inp_p = jnp.zeros((Bp, d_in_pad), jnp.float32).at[:B, :d_in].set(inp)

    h = fused_skip_mlp(inp_p, params["w0"], params["b0"], params["ws"],
                       params["bs"], params["w_skip"],
                       skip_idx=skip_idx, num_layers=num_layers, slope=slope)
    assert params["w_final_q"].shape[1] == n_pad
    x_bf = h[:B].astype(jnp.bfloat16)         # tiny resident activation tile
    y = pallas_final_linear(x_bf, params["w_final_q"], params["w_final_scale"],
                            params["b_final"], tn=tn)
    y = y[:, :d_lin]
    return y.reshape(B, -1, H, W)             # NCHW, like x.reshape(B, -1, 200, 200)


# ------------------------------ pure-JAX references ----------------------------
def reference_forward_quant(inp, params, *, H, W, num_layers, skip_idx,
                            d_in, d_in_pad, d_lin, slope=0.01, **_unused):
    """Mirror of the kernels' arithmetic (same bf16/int8 quantized weights)."""
    B = inp.shape[0]
    x = jnp.zeros((B, d_in_pad), jnp.float32).at[:, :d_in].set(inp)
    inp_bf = x.astype(jnp.bfloat16)
    h = jnp.dot(inp_bf, params["w0"], preferred_element_type=jnp.float32) + params["b0"]
    if 0 < num_layers - 2:
        h = _leaky(h, slope)
    n_sq = params["ws"].shape[0]
    for l in range(1, n_sq + 1):
        y = jnp.dot(h.astype(jnp.bfloat16), params["ws"][l - 1],
                    preferred_element_type=jnp.float32)
        if l == skip_idx:
            y = y + jnp.dot(inp_bf, params["w_skip"],
                            preferred_element_type=jnp.float32)
        y = y + params["bs"][l - 1]
        if l < num_layers - 2:
            y = _leaky(y, slope)
        h = y
    w = params["w_final_q"].astype(jnp.bfloat16)
    y = jnp.dot(h.astype(jnp.bfloat16), w, preferred_element_type=jnp.float32)
    y = y * params["w_final_scale"] + params["b_final"]
    return y[:, :d_lin].reshape(B, -1, H, W)


def reference_forward_f32(inp, ref_params, *, H, W, num_layers, skip_idx,
                          d_in, d_in_pad, slope=0.01, **_unused):
    """Full-precision reference (true module semantics, f32 weights)."""
    B = inp.shape[0]
    x = jnp.zeros((B, d_in_pad), jnp.float32).at[:, :d_in].set(inp)
    inp_p = x
    h = x @ ref_params["w0"] + ref_params["b0"]
    if 0 < num_layers - 2:
        h = _leaky(h, slope)
    n_sq = ref_params["ws"].shape[0]
    for l in range(1, n_sq + 1):
        y = h @ ref_params["ws"][l - 1]
        if l == skip_idx:
            y = y + inp_p @ ref_params["w_skip"]
        y = y + ref_params["bs"][l - 1]
        if l < num_layers - 2:
            y = _leaky(y, slope)
        h = y
    y = h @ ref_params["w_final"] + ref_params["b_final"]
    return y.reshape(B, -1, H, W)


# ----------------------------------- main ---------------------------------------
if __name__ == "__main__":
    # Small, module-consistent shapes:
    #   original: d_in=85, d_hidden=256, depth=6, skip_layer=[3], d_lin=200*200*6
    #   scaled:   same MLP, output spatial 16x16 with 4 channels -> d_lin=1024
    B = 2
    D_IN = 85
    D_HIDDEN = 256
    DEPTH = 6
    SKIP_LAYER = (3,)
    H = W = 16
    C_OUT = 4
    D_LIN = C_OUT * H * W   # 1024

    key = jax.random.PRNGKey(0)
    k_inp, k_par = jax.random.split(key)

    x = jax.random.normal(k_inp, (B, D_IN), jnp.float32)
    params, ref_params, cfg = init_params(k_par, D_IN, D_HIDDEN, DEPTH,
                                          SKIP_LAYER, D_LIN)

    fwd = jax.jit(functools.partial(dis_decoder_linear_forward, H=H, W=W, **cfg))
    out = fwd(x, params)
    jax.block_until_ready(out)
    assert out.shape == (B, C_OUT, H, W), out.shape

    # 1) kernel math vs a pure-JAX model using the SAME quantized weights (tight).
    ref_q = reference_forward_quant(x, params, H=H, W=W, **cfg)
    scale_q = float(jnp.max(jnp.abs(ref_q))) + 1.0
    err_q = float(jnp.max(jnp.abs(out - ref_q)))
    assert err_q <= 2e-3 * scale_q, ("quantized-reference mismatch", err_q, scale_q)

    # 2) quantization error vs the true f32-weight module (loose tolerance).
    ref_f = reference_forward_f32(x, ref_params, H=H, W=W, **cfg)
    scale_f = float(jnp.max(jnp.abs(ref_f))) + 1.0
    err_f = float(jnp.max(jnp.abs(out - ref_f)))
    assert err_f <= 3e-2 * scale_f, ("f32-reference mismatch", err_f, scale_f)

    print("KERNEL_OK")
</pallas_src>

<mosaic_0001>
module attributes {stable_mosaic.version = 11 : i64} {
  func.func @_final_linear_kernel(%arg0: i32, %arg1: memref<2x256xbf16, #tpu.memory_space<vmem>>, %arg2: memref<256x1024xi8, #tpu.memory_space<vmem>>, %arg3: memref<1x1024xf32, #tpu.memory_space<vmem>>, %arg4: memref<1x1024xf32, #tpu.memory_space<vmem>>, %arg5: memref<2x1024xf32, #tpu.memory_space<vmem>>) attributes {dimension_semantics = [#tpu.dimension_semantics<parallel>], iteration_bounds = array<i64: 1>, scalar_prefetch = 0 : i64, scratch_operands = 0 : i64, tpu.core_type = #tpu.core_type<tc>, window_params = [{pipeline_mode = #tpu.pipeline_mode<synchronous>, transform_indices = @transform_0, window_bounds = array<i64: 2, 256>}, {pipeline_mode = #tpu.pipeline_mode<double_buffered>, transform_indices = @transform_1, window_bounds = array<i64: 256, 1024>}, {transform_indices = @transform_2, window_bounds = array<i64: 1, 1024>}, {transform_indices = @transform_3, window_bounds = array<i64: 1, 1024>}, {transform_indices = @transform_4, window_bounds = array<i64: 2, 1024>}]} {
    %c0 = arith.constant 0 : index
    %c0_0 = arith.constant 0 : index
    %0 = vector.load %arg1[%c0, %c0_0] : memref<2x256xbf16, #tpu.memory_space<vmem>>, vector<2x256xbf16>
    %c0_1 = arith.constant 0 : index
    %c0_2 = arith.constant 0 : index
    %1 = vector.load %arg2[%c0_1, %c0_2] : memref<256x1024xi8, #tpu.memory_space<vmem>>, vector<256x1024xi8>
    %2 = arith.sitofp %1 : vector<256x1024xi8> to vector<256x1024xbf16>
    %cst = arith.constant dense<0.000000e+00> : vector<2x1024xf32>
    %3 = tpu.matmul %0, %2, %cst {dimension_numbers = #tpu.dot_dimension_numbers<[1], [0], [0], [1], [0, 0, 1, 1], [], []>} : vector<2x256xbf16>, vector<256x1024xbf16>, vector<2x1024xf32> -> vector<2x1024xf32>
    %c0_3 = arith.constant 0 : index
    %c0_4 = arith.constant 0 : index
    %4 = vector.load %arg3[%c0_3, %c0_4] : memref<1x1024xf32, #tpu.memory_space<vmem>>, vector<1x1024xf32>
    %5 = vector.broadcast %4 : vector<1x1024xf32> to vector<2x1024xf32>
    %6 = arith.mulf %3, %5 : vector<2x1024xf32>
    %c0_5 = arith.constant 0 : index
    %c0_6 = arith.constant 0 : index
    %7 = vector.load %arg4[%c0_5, %c0_6] : memref<1x1024xf32, #tpu.memory_space<vmem>>, vector<1x1024xf32>
    %8 = vector.broadcast %7 : vector<1x1024xf32> to vector<2x1024xf32>
    %9 = arith.addf %6, %8 : vector<2x1024xf32>
    %c0_7 = arith.constant 0 : index
    %c0_8 = arith.constant 0 : index
    %10 = vector.load %arg5[%c0_7, %c0_8] : memref<2x1024xf32, #tpu.memory_space<vmem>>, vector<2x1024xf32>
    tpu.vector_store %arg5[%c0_7, %c0_8], %9 {strides = array<i32>} : memref<2x1024xf32, #tpu.memory_space<vmem>>, vector<2x1024xf32>,
    return
  }
  func.func @transform_0(%arg0: i32) -> (i32, i32) {
    %c0_i32 = arith.constant 0 : i32
    %c0_i32_0 = arith.constant 0 : i32
    %c0_i32_1 = arith.constant 0 : i32
    return %c0_i32, %c0_i32_0 : i32, i32
  }
  func.func @transform_1(%arg0: i32) -> (i32, i32) {
    %c0_i32 = arith.constant 0 : i32
    %c0_i32_0 = arith.constant 0 : i32
    return %c0_i32, %arg0 : i32, i32
  }
  func.func @transform_2(%arg0: i32) -> (i32, i32) {
    %c0_i32 = arith.constant 0 : i32
    %c0_i32_0 = arith.constant 0 : i32
    return %c0_i32, %arg0 : i32, i32
  }
  func.func @transform_3(%arg0: i32) -> (i32, i32) {
    %c0_i32 = arith.constant 0 : i32
    %c0_i32_0 = arith.constant 0 : i32
    return %c0_i32, %arg0 : i32, i32
  }
  func.func @transform_4(%arg0: i32) -> (i32, i32) {
    %c0_i32 = arith.constant 0 : i32
    %c0_i32_0 = arith.constant 0 : i32
    return %c0_i32, %arg0 : i32, i32
  }
}

module attributes {stable_mosaic.version = 11 : i64} {
  func.func @_mlp_kernel(%arg0: i32, %arg1: memref<8x128xf32, #tpu.memory_space<vmem>>, %arg2: memref<128x256xbf16, #tpu.memory_space<vmem>>, %arg3: memref<1x256xf32, #tpu.memory_space<vmem>>, %arg4: memref<6x256x256xbf16, #tpu.memory_space<vmem>>, %arg5: memref<6x1x256xf32, #tpu.memory_space<vmem>>, %arg6: memref<128x256xbf16, #tpu.memory_space<vmem>>, %arg7: memref<8x256xf32, #tpu.memory_space<vmem>>) attributes {dimension_semantics = [#tpu.dimension_semantics<arbitrary>], iteration_bounds = array<i64: 1>, scalar_prefetch = 0 : i64, scratch_operands = 0 : i64, tpu.core_type = #tpu.core_type<tc>, window_params = [{pipeline_mode = #tpu.pipeline_mode<synchronous>, transform_indices = @transform_0, window_bounds = array<i64: 8, 128>}, {pipeline_mode = #tpu.pipeline_mode<synchronous>, transform_indices = @transform_1, window_bounds = array<i64: 128, 256>}, {pipeline_mode = #tpu.pipeline_mode<synchronous>, transform_indices = @transform_2, window_bounds = array<i64: 1, 256>}, {pipeline_mode = #tpu.pipeline_mode<synchronous>, transform_indices = @transform_3, window_bounds = array<i64: 6, 256, 256>}, {pipeline_mode = #tpu.pipeline_mode<synchronous>, transform_indices = @transform_4, window_bounds = array<i64: 6, 1, 256>}, {pipeline_mode = #tpu.pipeline_mode<synchronous>, transform_indices = @transform_5, window_bounds = array<i64: 128, 256>}, {pipeline_mode = #tpu.pipeline_mode<synchronous>, transform_indices = @transform_6, window_bounds = array<i64: 8, 256>}]} {
    %c0 = arith.constant 0 : index
    %c0_0 = arith.constant 0 : index
    %0 = vector.load %arg1[%c0, %c0_0] : memref<8x128xf32, #tpu.memory_space<vmem>>, vector<8x128xf32>
    %1 = arith.truncf %0 : vector<8x128xf32> to vector<8x128xbf16>
    %c0_1 = arith.constant 0 : index
    %c0_2 = arith.constant 0 : index
    %2 = vector.load %arg2[%c0_1, %c0_2] : memref<128x256xbf16, #tpu.memory_space<vmem>>, vector<128x256xbf16>
    %cst = arith.constant dense<0.000000e+00> : vector<8x256xf32>
    %3 = tpu.matmul %1, %2, %cst {dimension_numbers = #tpu.dot_dimension_numbers<[1], [0], [0], [1], [0, 0, 1, 1], [], []>} : vector<8x128xbf16>, vector<128x256xbf16>, vector<8x256xf32> -> vector<8x256xf32>
    %c0_3 = arith.constant 0 : index
    %c0_4 = arith.constant 0 : index
    %4 = vector.load %arg3[%c0_3, %c0_4] : memref<1x256xf32, #tpu.memory_space<vmem>>, vector<1x256xf32>
    %5 = vector.broadcast %4 : vector<1x256xf32> to vector<8x256xf32>
    %6 = arith.addf %3, %5 : vector<8x256xf32>
    %cst_5 = arith.constant 0.000000e+00 : f32
    %7 = vector.broadcast %cst_5 : f32 to vector<8x256xf32>
    %8 = arith.cmpf oge, %6, %7 : vector<8x256xf32>
    %cst_6 = arith.constant 0.00999999977 : f32
    %9 = vector.broadcast %cst_6 : f32 to vector<8x256xf32>
    %10 = arith.mulf %9, %6 : vector<8x256xf32>
    %11 = arith.select %8, %6, %10 : vector<8x256xi1>, vector<8x256xf32>
    %12 = arith.truncf %11 : vector<8x256xf32> to vector<8x256xbf16>
    %c0_7 = arith.constant 0 : index
    %c0_8 = arith.constant 0 : index
    %c0_9 = arith.constant 0 : index
    %13 = vector.load %arg4[%c0_7, %c0_8, %c0_9] : memref<6x256x256xbf16, #tpu.memory_space<vmem>>, vector<1x256x256xbf16>
    %14 = vector.shape_cast %13 : vector<1x256x256xbf16> to vector<256x256xbf16>
    %cst_10 = arith.constant dense<0.000000e+00> : vector<8x256xf32>
    %15 = tpu.matmul %12, %14, %cst_10 {dimension_numbers = #tpu.dot_dimension_numbers<[1], [0], [0], [1], [0, 0, 1, 1], [], []>} : vector<8x256xbf16>, vector<256x256xbf16>, vector<8x256xf32> -> vector<8x256xf32>
    %c0_11 = arith.constant 0 : index
    %c0_12 = arith.constant 0 : index
    %c0_13 = arith.constant 0 : index
    %16 = vector.load %arg5[%c0_11, %c0_12, %c0_13] : memref<6x1x256xf32, #tpu.memory_space<vmem>>, vector<1x1x256xf32>
    %17 = vector.shape_cast %16 : vector<1x1x256xf32> to vector<1x256xf32>
    %18 = vector.broadcast %17 : vector<1x256xf32> to vector<8x256xf32>
    %19 = arith.addf %15, %18 : vector<8x256xf32>
    %cst_14 = arith.constant 0.000000e+00 : f32
    %20 = vector.broadcast %cst_14 : f32 to vector<8x256xf32>
    %21 = arith.cmpf oge, %19, %20 : vector<8x256xf32>
    %cst_15 = arith.constant 0.00999999977 : f32
    %22 = vector.broadcast %cst_15 : f32 to vector<8x256xf32>
    %23 = arith.mulf %22, %19 : vector<8x256xf32>
    %24 = arith.select %21, %19, %23 : vector<8x256xi1>, vector<8x256xf32>
    %25 = arith.truncf %24 : vector<8x256xf32> to vector<8x256xbf16>
    %c1 = arith.constant 1 : index
    %c0_16 = arith.constant 0 : index
    %c0_17 = arith.constant 0 : index
    %26 = vector.load %arg4[%c1, %c0_16, %c0_17] : memref<6x256x256xbf16, #tpu.memory_space<vmem>>, vector<1x256x256xbf16>
    %27 = vector.shape_cast %26 : vector<1x256x256xbf16> to vector<256x256xbf16>
    %cst_18 = arith.constant dense<0.000000e+00> : vector<8x256xf32>
    %28 = tpu.matmul %25, %27, %cst_18 {dimension_numbers = #tpu.dot_dimension_numbers<[1], [0], [0], [1], [0, 0, 1, 1], [], []>} : vector<8x256xbf16>, vector<256x256xbf16>, vector<8x256xf32> -> vector<8x256xf32>
    %c1_19 = arith.constant 1 : index
    %c0_20 = arith.constant 0 : index
    %c0_21 = arith.constant 0 : index
    %29 = vector.load %arg5[%c1_19, %c0_20, %c0_21] : memref<6x1x256xf32, #tpu.memory_space<vmem>>, vector<1x1x256xf32>
    %30 = vector.shape_cast %29 : vector<1x1x256xf32> to vector<1x256xf32>
    %31 = vector.broadcast %30 : vector<1x256xf32> to vector<8x256xf32>
    %32 = arith.addf %28, %31 : vector<8x256xf32>
    %cst_22 = arith.constant 0.000000e+00 : f32
    %33 = vector.broadcast %cst_22 : f32 to vector<8x256xf32>
    %34 = arith.cmpf oge, %32, %33 : vector<8x256xf32>
    %cst_23 = arith.constant 0.00999999977 : f32
    %35 = vector.broadcast %cst_23 : f32 to vector<8x256xf32>
    %36 = arith.mulf %35, %32 : vector<8x256xf32>
    %37 = arith.select %34, %32, %36 : vector<8x256xi1>, vector<8x256xf32>
    %38 = arith.truncf %37 : vector<8x256xf32> to vector<8x256xbf16>
    %c2 = arith.constant 2 : index
    %c0_24 = arith.constant 0 : index
    %c0_25 = arith.constant 0 : index
    %39 = vector.load %arg4[%c2, %c0_24, %c0_25] : memref<6x256x256xbf16, #tpu.memory_space<vmem>>, vector<1x256x256xbf16>
    %40 = vector.shape_cast %39 : vector<1x256x256xbf16> to vector<256x256xbf16>
    %cst_26 = arith.constant dense<0.000000e+00> : vector<8x256xf32>
    %41 = tpu.matmul %38, %40, %cst_26 {dimension_numbers = #tpu.dot_dimension_numbers<[1], [0], [0], [1], [0, 0, 1, 1], [], []>} : vector<8x256xbf16>, vector<256x256xbf16>, vector<8x256xf32> -> vector<8x256xf32>
    %c0_27 = arith.constant 0 : index
    %c0_28 = arith.constant 0 : index
    %42 = vector.load %arg6[%c0_27, %c0_28] : memref<128x256xbf16, #tpu.memory_space<vmem>>, vector<128x256xbf16>
    %cst_29 = arith.constant dense<0.000000e+00> : vector<8x256xf32>
    %43 = tpu.matmul %1, %42, %cst_29 {dimension_numbers = #tpu.dot_dimension_numbers<[1], [0], [0], [1], [0, 0, 1, 1], [], []>} : vector<8x128xbf16>, vector<128x256xbf16>, vector<8x256xf32> -> vector<8x256xf32>
    %44 = arith.addf %41, %43 : vector<8x256xf32>
    %c2_30 = arith.constant 2 : index
    %c0_31 = arith.constant 0 : index
    %c0_32 = arith.constant 0 : index
    %45 = vector.load %arg5[%c2_30, %c0_31, %c0_32] : memref<6x1x256xf32, #tpu.memory_space<vmem>>, vector<1x1x256xf32>
    %46 = vector.shape_cast %45 : vector<1x1x256xf32> to vector<1x256xf32>
    %47 = vector.broadcast %46 : vector<1x256xf32> to vector<8x256xf32>
    %48 = arith.addf %44, %47 : vector<8x256xf32>
    %cst_33 = arith.constant 0.000000e+00 : f32
    %49 = vector.broadcast %cst_33 : f32 to vector<8x256xf32>
    %50 = arith.cmpf oge, %48, %49 : vector<8x256xf32>
    %cst_34 = arith.constant 0.00999999977 : f32
    %51 = vector.broadcast %cst_34 : f32 to vector<8x256xf32>
    %52 = arith.mulf %51, %48 : vector<8x256xf32>
    %53 = arith.select %50, %48, %52 : vector<8x256xi1>, vector<8x256xf32>
    %54 = arith.truncf %53 : vector<8x256xf32> to vector<8x256xbf16>
    %c3 = arith.constant 3 : index
    %c0_35 = arith.constant 0 : index
    %c0_36 = arith.constant 0 : index
    %55 = vector.load %arg4[%c3, %c0_35, %c0_36] : memref<6x256x256xbf16, #tpu.memory_space<vmem>>, vector<1x256x256xbf16>
    %56 = vector.shape_cast %55 : vector<1x256x256xbf16> to vector<256x256xbf16>
    %cst_37 = arith.constant dense<0.000000e+00> : vector<8x256xf32>
    %57 = tpu.matmul %54, %56, %cst_37 {dimension_numbers = #tpu.dot_dimension_numbers<[1], [0], [0], [1], [0, 0, 1, 1], [], []>} : vector<8x256xbf16>, vector<256x256xbf16>, vector<8x256xf32> -> vector<8x256xf32>
    %c3_38 = arith.constant 3 : index
    %c0_39 = arith.constant 0 : index
    %c0_40 = arith.constant 0 : index
    %58 = vector.load %arg5[%c3_38, %c0_39, %c0_40] : memref<6x1x256xf32, #tpu.memory_space<vmem>>, vector<1x1x256xf32>
    %59 = vector.shape_cast %58 : vector<1x1x256xf32> to vector<1x256xf32>
    %60 = vector.broadcast %59 : vector<1x256xf32> to vector<8x256xf32>
    %61 = arith.addf %57, %60 : vector<8x256xf32>
    %cst_41 = arith.constant 0.000000e+00 : f32
    %62 = vector.broadcast %cst_41 : f32 to vector<8x256xf32>
    %63 = arith.cmpf oge, %61, %62 : vector<8x256xf32>
    %cst_42 = arith.constant 0.00999999977 : f32
    %64 = vector.broadcast %cst_42 : f32 to vector<8x256xf32>
    %65 = arith.mulf %64, %61 : vector<8x256xf32>
    %66 = arith.select %63, %61, %65 : vector<8x256xi1>, vector<8x256xf32>
    %67 = arith.truncf %66 : vector<8x256xf32> to vector<8x256xbf16>
    %c4 = arith.constant 4 : index
    %c0_43 = arith.constant 0 : index
    %c0_44 = arith.constant 0 : index
    %68 = vector.load %arg4[%c4, %c0_43, %c0_44] : memref<6x256x256xbf16, #tpu.memory_space<vmem>>, vector<1x256x256xbf16>
    %69 = vector.shape_cast %68 : vector<1x256x256xbf16> to vector<256x256xbf16>
    %cst_45 = arith.constant dense<0.000000e+00> : vector<8x256xf32>
    %70 = tpu.matmul %67, %69, %cst_45 {dimension_numbers = #tpu.dot_dimension_numbers<[1], [0], [0], [1], [0, 0, 1, 1], [], []>} : vector<8x256xbf16>, vector<256x256xbf16>, vector<8x256xf32> -> vector<8x256xf32>
    %c4_46 = arith.constant 4 : index
    %c0_47 = arith.constant 0 : index
    %c0_48 = arith.constant 0 : index
    %71 = vector.load %arg5[%c4_46, %c0_47, %c0_48] : memref<6x1x256xf32, #tpu.memory_space<vmem>>, vector<1x1x256xf32>
    %72 = vector.shape_cast %71 : vector<1x1x256xf32> to vector<1x256xf32>
    %73 = vector.broadcast %72 : vector<1x256xf32> to vector<8x256xf32>
    %74 = arith.addf %70, %73 : vector<8x256xf32>
    %cst_49 = arith.constant 0.000000e+00 : f32
    %75 = vector.broadcast %cst_49 : f32 to vector<8x256xf32>
    %76 = arith.cmpf oge, %74, %75 : vector<8x256xf32>
    %cst_50 = arith.constant 0.00999999977 : f32
    %77 = vector.broadcast %cst_50 : f32 to vector<8x256xf32>
    %78 = arith.mulf %77, %74 : vector<8x256xf32>
    %79 = arith.select %76, %74, %78 : vector<8x256xi1>, vector<8x256xf32>
    %80 = arith.truncf %79 : vector<8x256xf32> to vector<8x256xbf16>
    %c5 = arith.constant 5 : index
    %c0_51 = arith.constant 0 : index
    %c0_52 = arith.constant 0 : index
    %81 = vector.load %arg4[%c5, %c0_51, %c0_52] : memref<6x256x256xbf16, #tpu.memory_space<vmem>>, vector<1x256x256xbf16>
    %82 = vector.shape_cast %81 : vector<1x256x256xbf16> to vector<256x256xbf16>
    %cst_53 = arith.constant dense<0.000000e+00> : vector<8x256xf32>
    %83 = tpu.matmul %80, %82, %cst_53 {dimension_numbers = #tpu.dot_dimension_numbers<[1], [0], [0], [1], [0, 0, 1, 1], [], []>} : vector<8x256xbf16>, vector<256x256xbf16>, vector<8x256xf32> -> vector<8x256xf32>
    %c5_54 = arith.constant 5 : index
    %c0_55 = arith.constant 0 : index
    %c0_56 = arith.constant 0 : index
    %84 = vector.load %arg5[%c5_54, %c0_55, %c0_56] : memref<6x1x256xf32, #tpu.memory_space<vmem>>, vector<1x1x256xf32>
    %85 = vector.shape_cast %84 : vector<1x1x256xf32> to vector<1x256xf32>
    %86 = vector.broadcast %85 : vector<1x256xf32> to vector<8x256xf32>
    %87 = arith.addf %83, %86 : vector<8x256xf32>
    %c0_57 = arith.constant 0 : index
    %c0_58 = arith.constant 0 : index
    %88 = vector.load %arg7[%c0_57, %c0_58] : memref<8x256xf32, #tpu.memory_space<vmem>>, vector<8x256xf32>
    tpu.vector_store %arg7[%c0_57, %c0_58], %87 {strides = array<i32>} : memref<8x256xf32, #tpu.memory_space<vmem>>, vector<8x256xf32>,
    return
  }
  func.func @transform_0(%arg0: i32) -> (i32, i32) {
    %c0_i32 = arith.constant 0 : i32
    %c0_i32_0 = arith.constant 0 : i32
    %c0_i32_1 = arith.constant 0 : i32
    return %c0_i32, %c0_i32_0 : i32, i32
  }
  func.func @transform_1(%arg0: i32) -> (i32, i32) {
    %c0_i32 = arith.constant 0 : i32
    %c0_i32_0 = arith.constant 0 : i32
    %c0_i32_1 = arith.constant 0 : i32
    return %c0_i32, %c0_i32_0 : i32, i32
  }
  func.func @transform_2(%arg0: i32) -> (i32, i32) {
    %c0_i32 = arith.constant 0 : i32
    %c0_i32_0 = arith.constant 0 : i32
    %c0_i32_1 = arith.constant 0 : i32
    return %c0_i32, %c0_i32_0 : i32, i32
  }
  func.func @transform_3(%arg0: i32) -> (i32, i32, i32) {
    %c0_i32 = arith.constant 0 : i32
    %c0_i32_0 = arith.constant 0 : i32
    %c0_i32_1 = arith.constant 0 : i32
    %c0_i32_2 = arith.constant 0 : i32
    return %c0_i32, %c0_i32_0, %c0_i32_1 : i32, i32, i32
  }
  func.func @transform_4(%arg0: i32) -> (i32, i32, i32) {
    %c0_i32 = arith.constant 0 : i32
    %c0_i32_0 = arith.constant 0 : i32
    %c0_i32_1 = arith.constant 0 : i32
    %c0_i32_2 = arith.constant 0 : i32
    return %c0_i32, %c0_i32_0, %c0_i32_1 : i32, i32, i32
  }
  func.func @transform_5(%arg0: i32) -> (i32, i32) {
    %c0_i32 = arith.constant 0 : i32
    %c0_i32_0 = arith.constant 0 : i32
    %c0_i32_1 = arith.constant 0 : i32
    return %c0_i32, %c0_i32_0 : i32, i32
  }
  func.func @transform_6(%arg0: i32) -> (i32, i32) {
    %c0_i32 = arith.constant 0 : i32
    %c0_i32_0 = arith.constant 0 : i32
    %c0_i32_1 = arith.constant 0 : i32
    return %c0_i32, %c0_i32_0 : i32, i32
  }
}

</mosaic_0001>

<llo_original>
// kernel: dis_decoder_linear_forward.3
$region0: #{dis_decoder_linear_forward.3}
  #allocation0 [shape = 'u32[]', space=smem, size = 0x4, offset = 0x4, fixed_abs, tag = 'smem constant byte address 0x4 - core index']
  #allocation1 [shape = 'u32[72,128]{1,0:T(1,128)}', space=vmem, size = 0x9000, scoped, tag = 'internal scratch']
  %s0 = inlined_call_operand.vmem [shape: bf16[2,256], index: 0, kind: input, shape index: {}]
  %s1 = inlined_call_operand.hbm [shape: s8[256,1024], index: 1, kind: input, shape index: {}]
  %s2 = inlined_call_operand.vmem [shape: f32[1,1024], index: 2, kind: input, shape index: {}]
  %s3 = inlined_call_operand.vmem [shape: f32[1,1024], index: 3, kind: input, shape index: {}]
  %s4 = inlined_call_operand.vmem [shape: f32[2,1024], index: 4, kind: output, shape index: {}]
  %s5 = sld [smem:[#allocation0]]
  $region30: #{dis_decoder_linear_forward.3} parent=0
    _
  %s7 = ssub.s32 1, %s5
  %s8 = scalar_select 0, %s7, %s5
  $region1: #{dis_decoder_linear_forward.3} parent=0
    #allocation2 [shape = 'u8[262144]{0}', space=vmem, size = 0x40000, scoped, tag = 'input window, operand 1, single buffered']
    #allocation3 [shape = 's32[1]{0}', space=sflag, size = 0x4, scoped, tag = 'scoped memory for dis_decoder_linear_forward.3']
    %9 = vsyncpa [#allocation3], 0
    // Predicated region
    $region2: #{dis_decoder_linear_forward.3} parent=1 // pred_check
      _
    $region3: #{dis_decoder_linear_forward.3} parent=1 // pred_check_branch
      %11 = sbr.rel (0) target = $region5
    $region4: #{dis_decoder_linear_forward.3} parent=1 // pred_region
      _
    $region5: #{dis_decoder_linear_forward.3} parent=1 // pred_fallthru
      _
    // Predicated region
    $region6: #{dis_decoder_linear_forward.3} parent=1 // pred_check
      _
    $region7: #{dis_decoder_linear_forward.3} parent=1 // pred_check_branch
      %13 = sbr.rel (0) target = $region9
    $region8: #{dis_decoder_linear_forward.3} parent=1 // pred_region
      %15 = vsyncadd [#allocation3], 0
      %s16 = sshll.u32 %s1, 4
      %s17 = int_to_ptr.hbm [resolvable:$true] %s16
      %s18 = sshll.u32 [#allocation2], 4
      %s19 = int_to_ptr.vmem [resolvable:$true] %s18
      %24 = dma.hbm_to_vmem [thread:$0]  %s17, 8192, %s19, [#allocation3], 1024, 1024, 64
    $region9: #{dis_decoder_linear_forward.3} parent=1 // pred_fallthru
      _
    // Predicated region
    $region10: #{dis_decoder_linear_forward.3} parent=1 // pred_check
      _
    $region11: #{dis_decoder_linear_forward.3} parent=1 // pred_check_branch
      %26 = sbr.rel (0) target = $region13
    $region12: #{dis_decoder_linear_forward.3} parent=1 // pred_region
      _
    $region13: #{dis_decoder_linear_forward.3} parent=1 // pred_fallthru
      _
    // Predicated region
    $region14: #{dis_decoder_linear_forward.3} parent=1 // pred_check
      _
    $region15: #{dis_decoder_linear_forward.3} parent=1 // pred_check_branch
      %28 = sbr.rel (0) target = $region17
    $region16: #{dis_decoder_linear_forward.3} parent=1 // pred_region
      _
    $region17: #{dis_decoder_linear_forward.3} parent=1 // pred_fallthru
      _
    // Predicated region
    $region18: #{dis_decoder_linear_forward.3} parent=1 // pred_check
      _
    $region19: #{dis_decoder_linear_forward.3} parent=1 // pred_check_branch
      %30 = sbr.rel (0) target = $region21
    $region20: #{dis_decoder_linear_forward.3} parent=1 // pred_region
      %32 = dma.done [#allocation3], 8192
    $region21: #{dis_decoder_linear_forward.3} parent=1 // pred_fallthru
      _
    %v33 = vld [vmem:[%s0] sm:$0x3]
    %v34 = vld [vmem:[#allocation2] sm:$0xff]
    %v35 = vld [vmem:[#allocation2 + $0x8] sm:$0xff]
    %v36 = vld [vmem:[#allocation2 + $0x10] sm:$0xff]
    %v37 = vld [vmem:[#allocation2 + $0x18] sm:$0xff]
    %v38 = vld [vmem:[#allocation2 + $0x20] sm:$0xff]
    %v39 = vld [vmem:[#allocation2 + $0x28] sm:$0xff]
    %v40 = vld [vmem:[#allocation2 + $0x30] sm:$0xff]
    %v41 = vld [vmem:[#allocation2 + $0x38] sm:$0xff]
    %v42 = vld [vmem:[#allocation2 + $0x40] sm:$0xff]
    %v43 = vld [vmem:[#allocation2 + $0x48] sm:$0xff]
    %v44 = vld [vmem:[#allocation2 + $0x50] sm:$0xff]
    %v45 = vld [vmem:[#allocation2 + $0x58] sm:$0xff]
    %v46 = vld [vmem:[#allocation2 + $0x60] sm:$0xff]
    %v47 = vld [vmem:[#allocation2 + $0x68] sm:$0xff]
    %v48 = vld [vmem:[#allocation2 + $0x70] sm:$0xff]
    %v49 = vld [vmem:[#allocation2 + $0x78] sm:$0xff]
    %v50 = vld [vmem:[#allocation2 + $0x80] sm:$0xff]
    %v51 = vld [vmem:[#allocation2 + $0x88] sm:$0xff]
    %v52 = vld [vmem:[#allocation2 + $0x90] sm:$0xff]
    %v53 = vld [vmem:[#allocation2 + $0x98] sm:$0xff]
    %v54 = vld [vmem:[#allocation2 + $0xa0] sm:$0xff]
    %v55 = vld [vmem:[#allocation2 + $0xa8] sm:$0xff]
    %v56 = vld [vmem:[#allocation2 + $0xb0] sm:$0xff]
    %v57 = vld [vmem:[#allocation2 + $0xb8] sm:$0xff]
    %v58 = vld [vmem:[#allocation2 + $0xc0] sm:$0xff]
    %v59 = vld [vmem:[#allocation2 + $0xc8] sm:$0xff]
    %v60 = vld [vmem:[#allocation2 + $0xd0] sm:$0xff]
    %v61 = vld [vmem:[#allocation2 + $0xd8] sm:$0xff]
    %v62 = vld [vmem:[#allocation2 + $0xe0] sm:$0xff]
    %v63 = vld [vmem:[#allocation2 + $0xe8] sm:$0xff]
    %v64 = vld [vmem:[#allocation2 + $0xf0] sm:$0xff]
    %v65 = vld [vmem:[#allocation2 + $0xf8] sm:$0xff]
    %v66 = vld [vmem:[#allocation2 + $0x100] sm:$0xff]
    %v67 = vld [vmem:[#allocation2 + $0x108] sm:$0xff]
    %v68 = vld [vmem:[#allocation2 + $0x110] sm:$0xff]
    %v69 = vld [vmem:[#allocation2 + $0x118] sm:$0xff]
    %v70 = vld [vmem:[#allocation2 + $0x120] sm:$0xff]
    %v71 = vld [vmem:[#allocation2 + $0x128] sm:$0xff]
    %v72 = vld [vmem:[#allocation2 + $0x130] sm:$0xff]
    %v73 = vld [vmem:[#allocation2 + $0x138] sm:$0xff]
    %v74 = vld [vmem:[#allocation2 + $0x140] sm:$0xff]
    %v75 = vld [vmem:[#allocation2 + $0x148] sm:$0xff]
    %v76 = vld [vmem:[#allocation2 + $0x150] sm:$0xff]
    %v77 = vld [vmem:[#allocation2 + $0x158] sm:$0xff]
    %v78 = vld [vmem:[#allocation2 + $0x160] sm:$0xff]
    %v79 = vld [vmem:[#allocation2 + $0x168] sm:$0xff]
    %v80 = vld [vmem:[#allocation2 + $0x170] sm:$0xff]
    %v81 = vld [vmem:[#allocation2 + $0x178] sm:$0xff]
    %v82 = vld [vmem:[#allocation2 + $0x180] sm:$0xff]
    %v83 = vld [vmem:[#allocation2 + $0x188] sm:$0xff]
    %v84 = vld [vmem:[#allocation2 + $0x190] sm:$0xff]
    %v85 = vld [vmem:[#allocation2 + $0x198] sm:$0xff]
    %v86 = vld [vmem:[#allocation2 + $0x1a0] sm:$0xff]
    %v87 = vld [vmem:[#allocation2 + $0x1a8] sm:$0xff]
    %v88 = vld [vmem:[#allocation2 + $0x1b0] sm:$0xff]
    %v89 = vld [vmem:[#allocation2 + $0x1b8] sm:$0xff]
    %v90 = vld [vmem:[#allocation2 + $0x1c0] sm:$0xff]
    %v91 = vld [vmem:[#allocation2 + $0x1c8] sm:$0xff]
    %v92 = vld [vmem:[#allocation2 + $0x1d0] sm:$0xff]
    %v93 = vld [vmem:[#allocation2 + $0x1d8] sm:$0xff]
    %v94 = vld [vmem:[#allocation2 + $0x1e0] sm:$0xff]
    %v95 = vld [vmem:[#allocation2 + $0x1e8] sm:$0xff]
    %v96 = vld [vmem:[#allocation2 + $0x1f0] sm:$0xff]
    %v97 = vld [vmem:[#allocation2 + $0x1f8] sm:$0xff]
    %v98 = vunpack.c.0.s8 %v34
    %v99 = vunpack.c.0.s8 %v35
    %v100 = vunpack.c.0.s8 %v36
    %v101 = vunpack.c.0.s8 %v37
    %v102 = vunpack.c.0.s8 %v38
    %v103 = vunpack.c.0.s8 %v39
    %v104 = vunpack.c.0.s8 %v40
    %v105 = vunpack.c.0.s8 %v41
    %v106 = vunpack.c.1.s8 %v34
    %v107 = vunpack.c.1.s8 %v35
    %v108 = vunpack.c.1.s8 %v36
    %v109 = vunpack.c.1.s8 %v37
    %v110 = vunpack.c.1.s8 %v38
    %v111 = vunpack.c.1.s8 %v39
    %v112 = vunpack.c.1.s8 %v40
    %v113 = vunpack.c.1.s8 %v41
    %v114 = vunpack.c.2.s8 %v34
    %v115 = vunpack.c.2.s8 %v35
    %v116 = vunpack.c.2.s8 %v36
    %v117 = vunpack.c.2.s8 %v37
    %v118 = vunpack.c.2.s8 %v38
    %v119 = vunpack.c.2.s8 %v39
    %v120 = vunpack.c.2.s8 %v40
    %v121 = vunpack.c.2.s8 %v41
    %v122 = vunpack.c.3.s8 %v34
    %v123 = vunpack.c.3.s8 %v35
    %v124 = vunpack.c.3.s8 %v36
    %v125 = vunpack.c.3.s8 %v37
    %v126 = vunpack.c.3.s8 %v38
    %v127 = vunpack.c.3.s8 %v39
    %v128 = vunpack.c.3.s8 %v40
    %v129 = vunpack.c.3.s8 %v41
    %v130 = vunpack.c.0.s8 %v42
    %v131 = vunpack.c.0.s8 %v43
    %v132 = vunpack.c.0.s8 %v44
    %v133 = vunpack.c.0.s8 %v45
    %v134 = vunpack.c.0.s8 %v46
    %v135 = vunpack.c.0.s8 %v47
    %v136 = vunpack.c.0.s8 %v48
    %v137 = vunpack.c.0.s8 %v49
    %v138 = vunpack.c.1.s8 %v42
    %v139 = vunpack.c.1.s8 %v43
    %v140 = vunpack.c.1.s8 %v44
    %v141 = vunpack.c.1.s8 %v45
    %v142 = vunpack.c.1.s8 %v46
    %v143 = vunpack.c.1.s8 %v47
    %v144 = vunpack.c.1.s8 %v48
    %v145 = vunpack.c.1.s8 %v49
    %v146 = vunpack.c.2.s8 %v42
    %v147 = vunpack.c.2.s8 %v43
    %v148 = vunpack.c.2.s8 %v44
    %v149 = vunpack.c.2.s8 %v45
    %v150 = vunpack.c.2.s8 %v46
    %v151 = vunpack.c.2.s8 %v47
    %v152 = vunpack.c.2.s8 %v48
    %v153 = vunpack.c.2.s8 %v49
    %v154 = vunpack.c.3.s8 %v42
    %v155 = vunpack.c.3.s8 %v43
    %v156 = vunpack.c.3.s8 %v44
    %v157 = vunpack.c.3.s8 %v45
    %v158 = vunpack.c.3.s8 %v46
    %v159 = vunpack.c.3.s8 %v47
    %v160 = vunpack.c.3.s8 %v48
    %v161 = vunpack.c.3.s8 %v49
    %v162 = vunpack.c.0.s8 %v50
    %v163 = vunpack.c.0.s8 %v51
    %v164 = vunpack.c.0.s8 %v52
    %v165 = vunpack.c.0.s8 %v53
    %v166 = vunpack.c.0.s8 %v54
    %v167 = vunpack.c.0.s8 %v55
    %v168 = vunpack.c.0.s8 %v56
    %v169 = vunpack.c.0.s8 %v57
    %v170 = vunpack.c.1.s8 %v50
    %v171 = vunpack.c.1.s8 %v51
    %v172 = vunpack.c.1.s8 %v52
    %v173 = vunpack.c.1.s8 %v53
    %v174 = vunpack.c.1.s8 %v54
    %v175 = vunpack.c.1.s8 %v55
    %v176 = vunpack.c.1.s8 %v56
    %v177 = vunpack.c.1.s8 %v57
    %v178 = vunpack.c.2.s8 %v50
    %v179 = vunpack.c.2.s8 %v51
    %v180 = vunpack.c.2.s8 %v52
    %v181 = vunpack.c.2.s8 %v53
    %v182 = vunpack.c.2.s8 %v54
    %v183 = vunpack.c.2.s8 %v55
    %v184 = vunpack.c.2.s8 %v56
    %v185 = vunpack.c.2.s8 %v57
    %v186 = vunpack.c.3.s8 %v50
    %v187 = vunpack.c.3.s8 %v51
    %v188 = vunpack.c.3.s8 %v52
    %v189 = vunpack.c.3.s8 %v53
    %v190 = vunpack.c.3.s8 %v54
    %v191 = vunpack.c.3.s8 %v55
    %v192 = vunpack.c.3.s8 %v56
    %v193 = vunpack.c.3.s8 %v57
    %v194 = vunpack.c.0.s8 %v58
    %v195 = vunpack.c.0.s8 %v59
    %v196 = vunpack.c.0.s8 %v60
    %v197 = vunpack.c.0.s8 %v61
    %v198 = vunpack.c.0.s8 %v62
    %v199 = vunpack.c.0.s8 %v63
    %v200 = vunpack.c.0.s8 %v64
    %v201 = vunpack.c.0.s8 %v65
    %v202 = vunpack.c.1.s8 %v58
    %v203 = vunpack.c.1.s8 %v59
    %v204 = vunpack.c.1.s8 %v60
    %v205 = vunpack.c.1.s8 %v61
    %v206 = vunpack.c.1.s8 %v62
    %v207 = vunpack.c.1.s8 %v63
    %v208 = vunpack.c.1.s8 %v64
    %v209 = vunpack.c.1.s8 %v65
    %v210 = vunpack.c.2.s8 %v58
    %v211 = vunpack.c.2.s8 %v59
    %v212 = vunpack.c.2.s8 %v60
    %v213 = vunpack.c.2.s8 %v61
    %v214 = vunpack.c.2.s8 %v62
    %v215 = vunpack.c.2.s8 %v63
    %v216 = vunpack.c.2.s8 %v64
    %v217 = vunpack.c.2.s8 %v65
    %v218 = vunpack.c.3.s8 %v58
    %v219 = vunpack.c.3.s8 %v59
    %v220 = vunpack.c.3.s8 %v60
    %v221 = vunpack.c.3.s8 %v61
    %v222 = vunpack.c.3.s8 %v62
    %v223 = vunpack.c.3.s8 %v63
    %v224 = vunpack.c.3.s8 %v64
    %v225 = vunpack.c.3.s8 %v65
    %v226 = vunpack.c.0.s8 %v66
    %v227 = vunpack.c.0.s8 %v67
    %v228 = vunpack.c.0.s8 %v68
    %v229 = vunpack.c.0.s8 %v69
    %v230 = vunpack.c.0.s8 %v70
    %v231 = vunpack.c.0.s8 %v71
    %v232 = vunpack.c.0.s8 %v72
    %v233 = vunpack.c.0.s8 %v73
    %v234 = vunpack.c.1.s8 %v66
    %v235 = vunpack.c.1.s8 %v67
    %v236 = vunpack.c.1.s8 %v68
    %v237 = vunpack.c.1.s8 %v69
    %v238 = vunpack.c.1.s8 %v70
    %v239 = vunpack.c.1.s8 %v71
    %v240 = vunpack.c.1.s8 %v72
    %v241 = vunpack.c.1.s8 %v73
    %v242 = vunpack.c.2.s8 %v66
    %v243 = vunpack.c.2.s8 %v67
    %v244 = vunpack.c.2.s8 %v68
    %v245 = vunpack.c.2.s8 %v69
    %v246 = vunpack.c.2.s8 %v70
    %v247 = vunpack.c.2.s8 %v71
    %v248 = vunpack.c.2.s8 %v72
    %v249 = vunpack.c.2.s8 %v73
    %v250 = vunpack.c.3.s8 %v66
    %v251 = vunpack.c.3.s8 %v67
    %v252 = vunpack.c.3.s8 %v68
    %v253 = vunpack.c.3.s8 %v69
    %v254 = vunpack.c.3.s8 %v70
    %v255 = vunpack.c.3.s8 %v71
    %v256 = vunpack.c.3.s8 %v72
    %v257 = vunpack.c.3.s8 %v73
    %v258 = vunpack.c.0.s8 %v74
    %v259 = vunpack.c.0.s8 %v75
    %v260 = vunpack.c.0.s8 %v76
    %v261 = vunpack.c.0.s8 %v77
    %v262 = vunpack.c.0.s8 %v78
    %v263 = vunpack.c.0.s8 %v79
    %v264 = vunpack.c.0.s8 %v80
    %v265 = vunpack.c.0.s8 %v81
    %v266 = vunpack.c.1.s8 %v74
    %v267 = vunpack.c.1.s8 %v75
    %v268 = vunpack.c.1.s8 %v76
    %v269 = vunpack.c.1.s8 %v77
    %v270 = vunpack.c.1.s8 %v78
    %v271 = vunpack.c.1.s8 %v79
    %v272 = vunpack.c.1.s8 %v80
    %v273 = vunpack.c.1.s8 %v81
    %v274 = vunpack.c.2.s8 %v74
    %v275 = vunpack.c.2.s8 %v75
    %v276 = vunpack.c.2.s8 %v76
    %v277 = vunpack.c.2.s8 %v77
    %v278 = vunpack.c.2.s8 %v78
    %v279 = vunpack.c.2.s8 %v79
    %v280 = vunpack.c.2.s8 %v80
    %v281 = vunpack.c.2.s8 %v81
    %v282 = vunpack.c.3.s8 %v74
    %v283 = vunpack.c.3.s8 %v75
    %v284 = vunpack.c.3.s8 %v76
    %v285 = vunpack.c.3.s8 %v77
    %v286 = vunpack.c.3.s8 %v78
    %v287 = vunpack.c.3.s8 %v79
    %v288 = vunpack.c.3.s8 %v80
    %v289 = vunpack.c.3.s8 %v81
    %v290 = vunpack.c.0.s8 %v82
    %v291 = vunpack.c.0.s8 %v83
    %v292 = vunpack.c.0.s8 %v84
    %v293 = vunpack.c.0.s8 %v85
    %v294 = vunpack.c.0.s8 %v86
    %v295 = vunpack.c.0.s8 %v87
    %v296 = vunpack.c.0.s8 %v88
    %v297 = vunpack.c.0.s8 %v89
    %v298 = vunpack.c.1.s8 %v82
    %v299 = vunpack.c.1.s8 %v83
    %v300 = vunpack.c.1.s8 %v84
    %v301 = vunpack.c.1.s8 %v85
    %v302 = vunpack.c.1.s8 %v86
    %v303 = vunpack.c.1.s8 %v87
    %v304 = vunpack.c.1.s8 %v88
    %v305 = vunpack.c.1.s8 %v89
    %v306 = vunpack.c.2.s8 %v82
    %v307 = vunpack.c.2.s8 %v83
    %v308 = vunpack.c.2.s8 %v84
    %v309 = vunpack.c.2.s8 %v85
    %v310 = vunpack.c.2.s8 %v86
    %v311 = vunpack.c.2.s8 %v87
    %v312 = vunpack.c.2.s8 %v88
    %v313 = vunpack.c.2.s8 %v89
    %v314 = vunpack.c.3.s8 %v82
    %v315 = vunpack.c.3.s8 %v83
    %v316 = vunpack.c.3.s8 %v84
    %v317 = vunpack.c.3.s8 %v85
    %v318 = vunpack.c.3.s8 %v86
    %v319 = vunpack.c.3.s8 %v87
    %v320 = vunpack.c.3.s8 %v88
    %v321 = vunpack.c.3.s8 %v89
    %v322 = vunpack.c.0.s8 %v90
    %v323 = vunpack.c.0.s8 %v91
    %v324 = vunpack.c.0.s8 %v92
    %v325 = vunpack.c.0.s8 %v93
    %v326 = vunpack.c.0.s8 %v94
    %v327 = vunpack.c.0.s8 %v95
    %v328 = vunpack.c.0.s8 %v96
    %v329 = vunpack.c.0.s8 %v97
    %v330 = vunpack.c.1.s8 %v90
    %v331 = vunpack.c.1.s8 %v91
    %v332 = vunpack.c.1.s8 %v92
    %v333 = vunpack.c.1.s8 %v93
    %v334 = vunpack.c.1.s8 %v94
    %v335 = vunpack.c.1.s8 %v95
    %v336 = vunpack.c.1.s8 %v96
    %v337 = vunpack.c.1.s8 %v97
    %v338 = vunpack.c.2.s8 %v90
    %v339 = vunpack.c.2.s8 %v91
    %v340 = vunpack.c.2.s8 %v92
    %v341 = vunpack.c.2.s8 %v93
    %v342 = vunpack.c.2.s8 %v94
    %v343 = vunpack.c.2.s8 %v95
    %v344 = vunpack.c.2.s8 %v96
    %v345 = vunpack.c.2.s8 %v97
    %v346 = vunpack.c.3.s8 %v90
    %v347 = vunpack.c.3.s8 %v91
    %v348 = vunpack.c.3.s8 %v92
    %v349 = vunpack.c.3.s8 %v93
    %v350 = vunpack.c.3.s8 %v94
    %v351 = vunpack.c.3.s8 %v95
    %v352 = vunpack.c.3.s8 %v96
    %v353 = vunpack.c.3.s8 %v97
    %v354 = vcvt.s32.f32 %v98
    %v355 = vcvt.s32.f32 %v99
    %v356 = vcvt.s32.f32 %v100
    %v357 = vcvt.s32.f32 %v101
    %v358 = vcvt.s32.f32 %v102
    %v359 = vcvt.s32.f32 %v103
    %v360 = vcvt.s32.f32 %v104
    %v361 = vcvt.s32.f32 %v105
    %v362 = vcvt.s32.f32 %v106
    %v363 = vcvt.s32.f32 %v107
    %v364 = vcvt.s32.f32 %v108
    %v365 = vcvt.s32.f32 %v109
    %v366 = vcvt.s32.f32 %v110
    %v367 = vcvt.s32.f32 %v111
    %v368 = vcvt.s32.f32 %v112
    %v369 = vcvt.s32.f32 %v113
    %v370 = vcvt.s32.f32 %v114
    %v371 = vcvt.s32.f32 %v115
    %v372 = vcvt.s32.f32 %v116
    %v373 = vcvt.s32.f32 %v117
    %v374 = vcvt.s32.f32 %v118
    %v375 = vcvt.s32.f32 %v119
    %v376 = vcvt.s32.f32 %v120
    %v377 = vcvt.s32.f32 %v121
    %v378 = vcvt.s32.f32 %v122
    %v379 = vcvt.s32.f32 %v123
    %v380 = vcvt.s32.f32 %v124
    %v381 = vcvt.s32.f32 %v125
    %v382 = vcvt.s32.f32 %v126
    %v383 = vcvt.s32.f32 %v127
    %v384 = vcvt.s32.f32 %v128
    %v385 = vcvt.s32.f32 %v129
    %v386 = vcvt.s32.f32 %v130
    %v387 = vcvt.s32.f32 %v131
    %v388 = vcvt.s32.f32 %v132
    %v389 = vcvt.s32.f32 %v133
    %v390 = vcvt.s32.f32 %v134
    %v391 = vcvt.s32.f32 %v135
    %v392 = vcvt.s32.f32 %v136
    %v393 = vcvt.s32.f32 %v137
    %v394 = vcvt.s32.f32 %v138
    %v395 = vcvt.s32.f32 %v139
    %v396 = vcvt.s32.f32 %v140
    %v397 = vcvt.s32.f32 %v141
    %v398 = vcvt.s32.f32 %v142
    %v399 = vcvt.s32.f32 %v143
    %v400 = vcvt.s32.f32 %v144
    %v401 = vcvt.s32.f32 %v145
    %v402 = vcvt.s32.f32 %v146
    %v403 = vcvt.s32.f32 %v147
    %v404 = vcvt.s32.f32 %v148
    %v405 = vcvt.s32.f32 %v149
    %v406 = vcvt.s32.f32 %v150
    %v407 = vcvt.s32.f32 %v151
    %v408 = vcvt.s32.f32 %v152
    %v409 = vcvt.s32.f32 %v153
    %v410 = vcvt.s32.f32 %v154
    %v411 = vcvt.s32.f32 %v155
    %v412 = vcvt.s32.f32 %v156
    %v413 = vcvt.s32.f32 %v157
    %v414 = vcvt.s32.f32 %v158
    %v415 = vcvt.s32.f32 %v159
    %v416 = vcvt.s32.f32 %v160
    %v417 = vcvt.s32.f32 %v161
    %v418 = vcvt.s32.f32 %v162
    %v419 = vcvt.s32.f32 %v163
    %v420 = vcvt.s32.f32 %v164
    %v421 = vcvt.s32.f32 %v165
    %v422 = vcvt.s32.f32 %v166
    %v423 = vcvt.s32.f32 %v167
    %v424 = vcvt.s32.f32 %v168
    %v425 = vcvt.s32.f32 %v169
    %v426 = vcvt.s32.f32 %v170
    %v427 = vcvt.s32.f32 %v171
    %v428 = vcvt.s32.f32 %v172
    %v429 = vcvt.s32.f32 %v173
    %v430 = vcvt.s32.f32 %v174
    %v431 = vcvt.s32.f32 %v175
    %v432 = vcvt.s32.f32 %v176
    %v433 = vcvt.s32.f32 %v177
    %v434 = vcvt.s32.f32 %v178
    %v435 = vcvt.s32.f32 %v179
    %v436 = vcvt.s32.f32 %v180
    %v437 = vcvt.s32.f32 %v181
    %v438 = vcvt.s32.f32 %v182
    %v439 = vcvt.s32.f32 %v183
    %v440 = vcvt.s32.f32 %v184
    %v441 = vcvt.s32.f32 %v185
    %v442 = vcvt.s32.f32 %v186
    %v443 = vcvt.s32.f32 %v187
    %v444 = vcvt.s32.f32 %v188
    %v445 = vcvt.s32.f32 %v189
    %v446 = vcvt.s32.f32 %v190
    %v447 = vcvt.s32.f32 %v191
    %v448 = vcvt.s32.f32 %v192
    %v449 = vcvt.s32.f32 %v193
    %v450 = vcvt.s32.f32 %v194
    %v451 = vcvt.s32.f32 %v195
    %v452 = vcvt.s32.f32 %v196
    %v453 = vcvt.s32.f32 %v197
    %v454 = vcvt.s32.f32 %v198
    %v455 = vcvt.s32.f32 %v199
    %v456 = vcvt.s32.f32 %v200
    %v457 = vcvt.s32.f32 %v201
    %v458 = vcvt.s32.f32 %v202
    %v459 = vcvt.s32.f32 %v203
    %v460 = vcvt.s32.f32 %v204
    %v461 = vcvt.s32.f32 %v205
    %v462 = vcvt.s32.f32 %v206
    %v463 = vcvt.s32.f32 %v207
    %v464 = vcvt.s32.f32 %v208
    %v465 = vcvt.s32.f32 %v209
    %v466 = vcvt.s32.f32 %v210
    %v467 = vcvt.s32.f32 %v211
    %v468 = vcvt.s32.f32 %v212
    %v469 = vcvt.s32.f32 %v213
    %v470 = vcvt.s32.f32 %v214
    %v471 = vcvt.s32.f32 %v215
    %v472 = vcvt.s32.f32 %v216
    %v473 = vcvt.s32.f32 %v217
    %v474 = vcvt.s32.f32 %v218
    %v475 = vcvt.s32.f32 %v219
    %v476 = vcvt.s32.f32 %v220
    %v477 = vcvt.s32.f32 %v221
    %v478 = vcvt.s32.f32 %v222
    %v479 = vcvt.s32.f32 %v223
    %v480 = vcvt.s32.f32 %v224
    %v481 = vcvt.s32.f32 %v225
    %v482 = vcvt.s32.f32 %v226
    %v483 = vcvt.s32.f32 %v227
    %v484 = vcvt.s32.f32 %v228
    %v485 = vcvt.s32.f32 %v229
    %v486 = vcvt.s32.f32 %v230
    %v487 = vcvt.s32.f32 %v231
    %v488 = vcvt.s32.f32 %v232
    %v489 = vcvt.s32.f32 %v233
    %v490 = vcvt.s32.f32 %v234
    %v491 = vcvt.s32.f32 %v235
    %v492 = vcvt.s32.f32 %v236
    %v493 = vcvt.s32.f32 %v237
    %v494 = vcvt.s32.f32 %v238
    %v495 = vcvt.s32.f32 %v239
    %v496 = vcvt.s32.f32 %v240
    %v497 = vcvt.s32.f32 %v241
    %v498 = vcvt.s32.f32 %v242
    %v499 = vcvt.s32.f32 %v243
    %v500 = vcvt.s32.f32 %v244
    %v501 = vcvt.s32.f32 %v245
    %v502 = vcvt.s32.f32 %v246
    %v503 = vcvt.s32.f32 %v247
    %v504 = vcvt.s32.f32 %v248
    %v505 = vcvt.s32.f32 %v249
    %v506 = vcvt.s32.f32 %v250
    %v507 = vcvt.s32.f32 %v251
    %v508 = vcvt.s32.f32 %v252
    %v509 = vcvt.s32.f32 %v253
    %v510 = vcvt.s32.f32 %v254
    %v511 = vcvt.s32.f32 %v255
    %v512 = vcvt.s32.f32 %v256
    %v513 = vcvt.s32.f32 %v257
    %v514 = vcvt.s32.f32 %v258
    %v515 = vcvt.s32.f32 %v259
    %v516 = vcvt.s32.f32 %v260
    %v517 = vcvt.s32.f32 %v261
    %v518 = vcvt.s32.f32 %v262
    %v519 = vcvt.s32.f32 %v263
    %v520 = vcvt.s32.f32 %v264
    %v521 = vcvt.s32.f32 %v265
    %v522 = vcvt.s32.f32 %v266
    %v523 = vcvt.s32.f32 %v267
    %v524 = vcvt.s32.f32 %v268
    %v525 = vcvt.s32.f32 %v269
    %v526 = vcvt.s32.f32 %v270
    %v527 = vcvt.s32.f32 %v271
    %v528 = vcvt.s32.f32 %v272
    %v529 = vcvt.s32.f32 %v273
    %v530 = vcvt.s32.f32 %v274
    %v531 = vcvt.s32.f32 %v275
    %v532 = vcvt.s32.f32 %v276
    %v533 = vcvt.s32.f32 %v277
    %v534 = vcvt.s32.f32 %v278
    %v535 = vcvt.s32.f32 %v279
    %v536 = vcvt.s32.f32 %v280
    %v537 = vcvt.s32.f32 %v281
    %v538 = vcvt.s32.f32 %v282
    %v539 = vcvt.s32.f32 %v283
    %v540 = vcvt.s32.f32 %v284
    %v541 = vcvt.s32.f32 %v285
    %v542 = vcvt.s32.f32 %v286
    %v543 = vcvt.s32.f32 %v287
    %v544 = vcvt.s32.f32 %v288
    %v545 = vcvt.s32.f32 %v289
    %v546 = vcvt.s32.f32 %v290
    %v547 = vcvt.s32.f32 %v291
    %v548 = vcvt.s32.f32 %v292
    %v549 = vcvt.s32.f32 %v293
    %v550 = vcvt.s32.f32 %v294
    %v551 = vcvt.s32.f32 %v295
    %v552 = vcvt.s32.f32 %v296
    %v553 = vcvt.s32.f32 %v297
    %v554 = vcvt.s32.f32 %v298
    %v555 = vcvt.s32.f32 %v299
    %v556 = vcvt.s32.f32 %v300
    %v557 = vcvt.s32.f32 %v301
    %v558 = vcvt.s32.f32 %v302
    %v559 = vcvt.s32.f32 %v303
    %v560 = vcvt.s32.f32 %v304
    %v561 = vcvt.s32.f32 %v305
    %v562 = vcvt.s32.f32 %v306
    %v563 = vcvt.s32.f32 %v307
    %v564 = vcvt.s32.f32 %v308
    %v565 = vcvt.s32.f32 %v309
    %v566 = vcvt.s32.f32 %v310
    %v567 = vcvt.s32.f32 %v311
    %v568 = vcvt.s32.f32 %v312
    %v569 = vcvt.s32.f32 %v313
    %v570 = vcvt.s32.f32 %v314
    %v571 = vcvt.s32.f32 %v315
    %v572 = vcvt.s32.f32 %v316
    %v573 = vcvt.s32.f32 %v317
    %v574 = vcvt.s32.f32 %v318
    %v575 = vcvt.s32.f32 %v319
    %v576 = vcvt.s32.f32 %v320
    %v577 = vcvt.s32.f32 %v321
    %v578 = vcvt.s32.f32 %v322
    %v579 = vcvt.s32.f32 %v323
    %v580 = vcvt.s32.f32 %v324
    %v581 = vcvt.s32.f32 %v325
    %v582 = vcvt.s32.f32 %v326
    %v583 = vcvt.s32.f32 %v327
    %v584 = vcvt.s32.f32 %v328
    %v585 = vcvt.s32.f32 %v329
    %v586 = vcvt.s32.f32 %v330
    %v587 = vcvt.s32.f32 %v331
    %v588 = vcvt.s32.f32 %v332
    %v589 = vcvt.s32.f32 %v333
    %v590 = vcvt.s32.f32 %v334
    %v591 = vcvt.s32.f32 %v335
    %v592 = vcvt.s32.f32 %v336
    %v593 = vcvt.s32.f32 %v337
    %v594 = vcvt.s32.f32 %v338
    %v595 = vcvt.s32.f32 %v339
    %v596 = vcvt.s32.f32 %v340
    %v597 = vcvt.s32.f32 %v341
    %v598 = vcvt.s32.f32 %v342
    %v599 = vcvt.s32.f32 %v343
    %v600 = vcvt.s32.f32 %v344
    %v601 = vcvt.s32.f32 %v345
    %v602 = vcvt.s32.f32 %v346
    %v603 = vcvt.s32.f32 %v347
    %v604 = vcvt.s32.f32 %v348
    %v605 = vcvt.s32.f32 %v349
    %v606 = vcvt.s32.f32 %v350
    %v607 = vcvt.s32.f32 %v351
    %v608 = vcvt.s32.f32 %v352
    %v609 = vcvt.s32.f32 %v353
    %v610 = vpack.c.bf16 %v362, %v354
    %v611 = vpack.c.bf16 %v363, %v355
    %v612 = vpack.c.bf16 %v364, %v356
    %v613 = vpack.c.bf16 %v365, %v357
    %v614 = vpack.c.bf16 %v366, %v358
    %v615 = vpack.c.bf16 %v367, %v359
    %v616 = vpack.c.bf16 %v368, %v360
    %v617 = vpack.c.bf16 %v369, %v361
    %v618 = vpack.c.bf16 %v378, %v370
    %v619 = vpack.c.bf16 %v379, %v371
    %v620 = vpack.c.bf16 %v380, %v372
    %v621 = vpack.c.bf16 %v381, %v373
    %v622 = vpack.c.bf16 %v382, %v374
    %v623 = vpack.c.bf16 %v383, %v375
    %v624 = vpack.c.bf16 %v384, %v376
    %v625 = vpack.c.bf16 %v385, %v377
    %v626 = vpack.c.bf16 %v394, %v386
    %v627 = vpack.c.bf16 %v395, %v387
    %v628 = vpack.c.bf16 %v396, %v388
    %v629 = vpack.c.bf16 %v397, %v389
    %v630 = vpack.c.bf16 %v398, %v390
    %v631 = vpack.c.bf16 %v399, %v391
    %v632 = vpack.c.bf16 %v400, %v392
    %v633 = vpack.c.bf16 %v401, %v393
    %v634 = vpack.c.bf16 %v410, %v402
    %v635 = vpack.c.bf16 %v411, %v403
    %v636 = vpack.c.bf16 %v412, %v404
    %v637 = vpack.c.bf16 %v413, %v405
    %v638 = vpack.c.bf16 %v414, %v406
    %v639 = vpack.c.bf16 %v415, %v407
    %v640 = vpack.c.bf16 %v416, %v408
    %v641 = vpack.c.bf16 %v417, %v409
    %v642 = vpack.c.bf16 %v426, %v418
    %v643 = vpack.c.bf16 %v427, %v419
    %v644 = vpack.c.bf16 %v428, %v420
    %v645 = vpack.c.bf16 %v429, %v421
    %v646 = vpack.c.bf16 %v430, %v422
    %v647 = vpack.c.bf16 %v431, %v423
    %v648 = vpack.c.bf16 %v432, %v424
    %v649 = vpack.c.bf16 %v433, %v425
    %v650 = vpack.c.bf16 %v442, %v434
    %v651 = vpack.c.bf16 %v443, %v435
    %v652 = vpack.c.bf16 %v444, %v436
    %v653 = vpack.c.bf16 %v445, %v437
    %v654 = vpack.c.bf16 %v446, %v438
    %v655 = vpack.c.bf16 %v447, %v439
    %v656 = vpack.c.bf16 %v448, %v440
    %v657 = vpack.c.bf16 %v449, %v441
    %v658 = vpack.c.bf16 %v458, %v450
    %v659 = vpack.c.bf16 %v459, %v451
    %v660 = vpack.c.bf16 %v460, %v452
    %v661 = vpack.c.bf16 %v461, %v453
    %v662 = vpack.c.bf16 %v462, %v454
    %v663 = vpack.c.bf16 %v463, %v455
    %v664 = vpack.c.bf16 %v464, %v456
    %v665 = vpack.c.bf16 %v465, %v457
    %v666 = vpack.c.bf16 %v474, %v466
    %v667 = vpack.c.bf16 %v475, %v467
    %v668 = vpack.c.bf16 %v476, %v468
    %v669 = vpack.c.bf16 %v477, %v469
    %v670 = vpack.c.bf16 %v478, %v470
    %v671 = vpack.c.bf16 %v479, %v471
    %v672 = vpack.c.bf16 %v480, %v472
    %v673 = vpack.c.bf16 %v481, %v473
    %v674 = vpack.c.bf16 %v490, %v482
    %v675 = vpack.c.bf16 %v491, %v483
    %v676 = vpack.c.bf16 %v492, %v484
    %v677 = vpack.c.bf16 %v493, %v485
    %v678 = vpack.c.bf16 %v494, %v486
    %v679 = vpack.c.bf16 %v495, %v487
    %v680 = vpack.c.bf16 %v496, %v488
    %v681 = vpack.c.bf16 %v497, %v489
    %v682 = vpack.c.bf16 %v506, %v498
    %v683 = vpack.c.bf16 %v507, %v499
    %v684 = vpack.c.bf16 %v508, %v500
    %v685 = vpack.c.bf16 %v509, %v501
    %v686 = vpack.c.bf16 %v510, %v502
    %v687 = vpack.c.bf16 %v511, %v503
    %v688 = vpack.c.bf16 %v512, %v504
    %v689 = vpack.c.bf16 %v513, %v505
    %v690 = vpack.c.bf16 %v522, %v514
    %v691 = vpack.c.bf16 %v523, %v515
    %v692 = vpack.c.bf16 %v524, %v516
    %v693 = vpack.c.bf16 %v525, %v517
    %v694 = vpack.c.bf16 %v526, %v518
    %v695 = vpack.c.bf16 %v527, %v519
    %v696 = vpack.c.bf16 %v528, %v520
    %v697 = vpack.c.bf16 %v529, %v521
    %v698 = vpack.c.bf16 %v538, %v530
    %v699 = vpack.c.bf16 %v539, %v531
    %v700 = vpack.c.bf16 %v540, %v532
    %v701 = vpack.c.bf16 %v541, %v533
    %v702 = vpack.c.bf16 %v542, %v534
    %v703 = vpack.c.bf16 %v543, %v535
    %v704 = vpack.c.bf16 %v544, %v536
    %v705 = vpack.c.bf16 %v545, %v537
    %v706 = vpack.c.bf16 %v554, %v546
    %v707 = vpack.c.bf16 %v555, %v547
    %v708 = vpack.c.bf16 %v556, %v548
    %v709 = vpack.c.bf16 %v557, %v549
    %v710 = vpack.c.bf16 %v558, %v550
    %v711 = vpack.c.bf16 %v559, %v551
    %v712 = vpack.c.bf16 %v560, %v552
    %v713 = vpack.c.bf16 %v561, %v553
    %v714 = vpack.c.bf16 %v570, %v562
    %v715 = vpack.c.bf16 %v571, %v563
    %v716 = vpack.c.bf16 %v572, %v564
    %v717 = vpack.c.bf16 %v573, %v565
    %v718 = vpack.c.bf16 %v574, %v566
    %v719 = vpack.c.bf16 %v575, %v567
    %v720 = vpack.c.bf16 %v576, %v568
    %v721 = vpack.c.bf16 %v577, %v569
    %v722 = vpack.c.bf16 %v586, %v578
    %v723 = vpack.c.bf16 %v587, %v579
    %v724 = vpack.c.bf16 %v588, %v580
    %v725 = vpack.c.bf16 %v589, %v581
    %v726 = vpack.c.bf16 %v590, %v582
    %v727 = vpack.c.bf16 %v591, %v583
    %v728 = vpack.c.bf16 %v592, %v584
    %v729 = vpack.c.bf16 %v593, %v585
    %v730 = vpack.c.bf16 %v602, %v594
    %v731 = vpack.c.bf16 %v603, %v595
    %v732 = vpack.c.bf16 %v604, %v596
    %v733 = vpack.c.bf16 %v605, %v597
    %v734 = vpack.c.bf16 %v606, %v598
    %v735 = vpack.c.bf16 %v607, %v599
    %v736 = vpack.c.bf16 %v608, %v600
    %v737 = vpack.c.bf16 %v609, %v601
    %739 = vst [vmem:[#allocation1] ss:$9 sm:$0xff] %v33
    %v740 = vld [vmem:[#allocation1] sm:$0xff]
    %v741 = vld [vmem:[#allocation1 + $0x9] sm:$0xff]
    %744 = vmatpush.bf16.msra.mxu0 %v666
    %745 = vmatpush.bf16.msra.mxu0 %v658
    %746 = vmatpush.bf16.msra.mxu0 %v650
    %747 = vmatpush.bf16.msra.mxu0 %v642
    %748 = vmatpush.bf16.msra.mxu0 %v634
    %749 = vmatpush.bf16.msra.mxu0 %v626
    %750 = vmatpush.bf16.msra.mxu0 %v618
    %751 = vmatpush.bf16.msra.mxu0 %v610
    %752 = vmatmul.bf16.gmra.mxu0 %v740
    %v753 = vpop.f32.mrf.mxu0
    %v754 = vadd.f32 0.0, %v753
    %v755 = vpop.f32.mrf.mxu0
    %756 = vdwg.mxu0
    %757 = vmatpush.bf16.msra.mxu0 %v730
    %758 = vmatpush.bf16.msra.mxu0 %v722
    %759 = vmatpush.bf16.msra.mxu0 %v714
    %760 = vmatpush.bf16.msra.mxu0 %v706
    %761 = vmatpush.bf16.msra.mxu0 %v698
    %762 = vmatpush.bf16.msra.mxu0 %v690
    %763 = vmatpush.bf16.msra.mxu0 %v682
    %764 = vmatpush.bf16.msra.mxu0 %v674
    %765 = vmatmul.bf16.gmra.mxu0 %v741
    %v766 = vpop.f32.mrf.mxu0
    %v767 = vadd.f32 %v754, %v766
    %v768 = vpop.f32.mrf.mxu0
    %769 = vdwg.mxu0
    %770 = vmatpush.bf16.msra.mxu0 %v667
    %771 = vmatpush.bf16.msra.mxu0 %v659
    %772 = vmatpush.bf16.msra.mxu0 %v651
    %773 = vmatpush.bf16.msra.mxu0 %v643
    %774 = vmatpush.bf16.msra.mxu0 %v635
    %775 = vmatpush.bf16.msra.mxu0 %v627
    %776 = vmatpush.bf16.msra.mxu0 %v619
    %777 = vmatpush.bf16.msra.mxu0 %v611
    %778 = vmatmul.bf16.gmra.mxu0 %v740
    %v779 = vpop.f32.mrf.mxu0
    %v780 = vadd.f32 0.0, %v779
    %v781 = vpop.f32.mrf.mxu0
    %782 = vdwg.mxu0
    %783 = vmatpush.bf16.msra.mxu0 %v731
    %784 = vmatpush.bf16.msra.mxu0 %v723
    %785 = vmatpush.bf16.msra.mxu0 %v715
    %786 = vmatpush.bf16.msra.mxu0 %v707
    %787 = vmatpush.bf16.msra.mxu0 %v699
    %788 = vmatpush.bf16.msra.mxu0 %v691
    %789 = vmatpush.bf16.msra.mxu0 %v683
    %790 = vmatpush.bf16.msra.mxu0 %v675
    %791 = vmatmul.bf16.gmra.mxu0 %v741
    %v792 = vpop.f32.mrf.mxu0
    %v793 = vadd.f32 %v780, %v792
    %v794 = vpop.f32.mrf.mxu0
    %795 = vdwg.mxu0
    %796 = vmatpush.bf16.msra.mxu0 %v668
    %797 = vmatpush.bf16.msra.mxu0 %v660
    %798 = vmatpush.bf16.msra.mxu0 %v652
    %799 = vmatpush.bf16.msra.mxu0 %v644
    %800 = vmatpush.bf16.msra.mxu0 %v636
    %801 = vmatpush.bf16.msra.mxu0 %v628
    %802 = vmatpush.bf16.msra.mxu0 %v620
    %803 = vmatpush.bf16.msra.mxu0 %v612
    %804 = vmatmul.bf16.gmra.mxu0 %v740
    %v805 = vpop.f32.mrf.mxu0
    %v806 = vadd.f32 0.0, %v805
    %v807 = vpop.f32.mrf.mxu0
    %808 = vdwg.mxu0
    %809 = vmatpush.bf16.msra.mxu0 %v732
    %810 = vmatpush.bf16.msra.mxu0 %v724
    %811 = vmatpush.bf16.msra.mxu0 %v716
    %812 = vmatpush.bf16.msra.mxu0 %v708
    %813 = vmatpush.bf16.msra.mxu0 %v700
    %814 = vmatpush.bf16.msra.mxu0 %v692
    %815 = vmatpush.bf16.msra.mxu0 %v684
    %816 = vmatpush.bf16.msra.mxu0 %v676
    %817 = vmatmul.bf16.gmra.mxu0 %v741
    %v818 = vpop.f32.mrf.mxu0
    %v819 = vadd.f32 %v806, %v818
    %v820 = vpop.f32.mrf.mxu0
    %821 = vdwg.mxu0
    %822 = vmatpush.bf16.msra.mxu0 %v669
    %823 = vmatpush.bf16.msra.mxu0 %v661
    %824 = vmatpush.bf16.msra.mxu0 %v653
    %825 = vmatpush.bf16.msra.mxu0 %v645
    %826 = vmatpush.bf16.msra.mxu0 %v637
    %827 = vmatpush.bf16.msra.mxu0 %v629
    %828 = vmatpush.bf16.msra.mxu0 %v621
    %829 = vmatpush.bf16.msra.mxu0 %v613
    %830 = vmatmul.bf16.gmra.mxu0 %v740
    %v831 = vpop.f32.mrf.mxu0
    %v832 = vadd.f32 0.0, %v831
    %v833 = vpop.f32.mrf.mxu0
    %834 = vdwg.mxu0
    %835 = vmatpush.bf16.msra.mxu0 %v733
    %836 = vmatpush.bf16.msra.mxu0 %v725
    %837 = vmatpush.bf16.msra.mxu0 %v717
    %838 = vmatpush.bf16.msra.mxu0 %v709
    %839 = vmatpush.bf16.msra.mxu0 %v701
    %840 = vmatpush.bf16.msra.mxu0 %v693
    %841 = vmatpush.bf16.msra.mxu0 %v685
    %842 = vmatpush.bf16.msra.mxu0 %v677
    %843 = vmatmul.bf16.gmra.mxu0 %v741
    %v844 = vpop.f32.mrf.mxu0
    %v845 = vadd.f32 %v832, %v844
    %v846 = vpop.f32.mrf.mxu0
    %847 = vdwg.mxu0
    %848 = vmatpush.bf16.msra.mxu0 %v670
    %849 = vmatpush.bf16.msra.mxu0 %v662
    %850 = vmatpush.bf16.msra.mxu0 %v654
    %851 = vmatpush.bf16.msra.mxu0 %v646
    %852 = vmatpush.bf16.msra.mxu0 %v638
    %853 = vmatpush.bf16.msra.mxu0 %v630
    %854 = vmatpush.bf16.msra.mxu0 %v622
    %855 = vmatpush.bf16.msra.mxu0 %v614
    %856 = vmatmul.bf16.gmra.mxu0 %v740
    %v857 = vpop.f32.mrf.mxu0
    %v858 = vadd.f32 0.0, %v857
    %v859 = vpop.f32.mrf.mxu0
    %860 = vdwg.mxu0
    %861 = vmatpush.bf16.msra.mxu0 %v734
    %862 = vmatpush.bf16.msra.mxu0 %v726
    %863 = vmatpush.bf16.msra.mxu0 %v718
    %864 = vmatpush.bf16.msra.mxu0 %v710
    %865 = vmatpush.bf16.msra.mxu0 %v702
    %866 = vmatpush.bf16.msra.mxu0 %v694
    %867 = vmatpush.bf16.msra.mxu0 %v686
    %868 = vmatpush.bf16.msra.mxu0 %v678
    %869 = vmatmul.bf16.gmra.mxu0 %v741
    %v870 = vpop.f32.mrf.mxu0
    %v871 = vadd.f32 %v858, %v870
    %v872 = vpop.f32.mrf.mxu0
    %873 = vdwg.mxu0
    %874 = vmatpush.bf16.msra.mxu0 %v671
    %875 = vmatpush.bf16.msra.mxu0 %v663
    %876 = vmatpush.bf16.msra.mxu0 %v655
    %877 = vmatpush.bf16.msra.mxu0 %v647
    %878 = vmatpush.bf16.msra.mxu0 %v639
    %879 = vmatpush.bf16.msra.mxu0 %v631
    %880 = vmatpush.bf16.msra.mxu0 %v623
    %881 = vmatpush.bf16.msra.mxu0 %v615
    %882 = vmatmul.bf16.gmra.mxu0 %v740
    %v883 = vpop.f32.mrf.mxu0
    %v884 = vadd.f32 0.0, %v883
    %v885 = vpop.f32.mrf.mxu0
    %886 = vdwg.mxu0
    %887 = vmatpush.bf16.msra.mxu0 %v735
    %888 = vmatpush.bf16.msra.mxu0 %v727
    %889 = vmatpush.bf16.msra.mxu0 %v719
    %890 = vmatpush.bf16.msra.mxu0 %v711
    %891 = vmatpush.bf16.msra.mxu0 %v703
    %892 = vmatpush.bf16.msra.mxu0 %v695
    %893 = vmatpush.bf16.msra.mxu0 %v687
    %894 = vmatpush.bf16.msra.mxu0 %v679
    %895 = vmatmul.bf16.gmra.mxu0 %v741
    %v896 = vpop.f32.mrf.mxu0
    %v897 = vadd.f32 %v884, %v896
    %v898 = vpop.f32.mrf.mxu0
    %899 = vdwg.mxu0
    %900 = vmatpush.bf16.msra.mxu0 %v672
    %901 = vmatpush.bf16.msra.mxu0 %v664
    %902 = vmatpush.bf16.msra.mxu0 %v656
    %903 = vmatpush.bf16.msra.mxu0 %v648
    %904 = vmatpush.bf16.msra.mxu0 %v640
    %905 = vmatpush.bf16.msra.mxu0 %v632
    %906 = vmatpush.bf16.msra.mxu0 %v624
    %907 = vmatpush.bf16.msra.mxu0 %v616
    %908 = vmatmul.bf16.gmra.mxu0 %v740
    %v909 = vpop.f32.mrf.mxu0
    %v910 = vadd.f32 0.0, %v909
    %v911 = vpop.f32.mrf.mxu0
    %912 = vdwg.mxu0
    %913 = vmatpush.bf16.msra.mxu0 %v736
    %914 = vmatpush.bf16.msra.mxu0 %v728
    %915 = vmatpush.bf16.msra.mxu0 %v720
    %916 = vmatpush.bf16.msra.mxu0 %v712
    %917 = vmatpush.bf16.msra.mxu0 %v704
    %918 = vmatpush.bf16.msra.mxu0 %v696
    %919 = vmatpush.bf16.msra.mxu0 %v688
    %920 = vmatpush.bf16.msra.mxu0 %v680
    %921 = vmatmul.bf16.gmra.mxu0 %v741
    %v922 = vpop.f32.mrf.mxu0
    %v923 = vadd.f32 %v910, %v922
    %v924 = vpop.f32.mrf.mxu0
    %925 = vdwg.mxu0
    %926 = vmatpush.bf16.msra.mxu0 %v673
    %927 = vmatpush.bf16.msra.mxu0 %v665
    %928 = vmatpush.bf16.msra.mxu0 %v657
    %929 = vmatpush.bf16.msra.mxu0 %v649
    %930 = vmatpush.bf16.msra.mxu0 %v641
    %931 = vmatpush.bf16.msra.mxu0 %v633
    %932 = vmatpush.bf16.msra.mxu0 %v625
    %933 = vmatpush.bf16.msra.mxu0 %v617
    %934 = vmatmul.bf16.gmra.mxu0 %v740
    %v935 = vpop.f32.mrf.mxu0
    %v936 = vadd.f32 0.0, %v935
    %v937 = vpop.f32.mrf.mxu0
    %938 = vdwg.mxu0
    %939 = vmatpush.bf16.msra.mxu0 %v737
    %940 = vmatpush.bf16.msra.mxu0 %v729
    %941 = vmatpush.bf16.msra.mxu0 %v721
    %942 = vmatpush.bf16.msra.mxu0 %v713
    %943 = vmatpush.bf16.msra.mxu0 %v705
    %944 = vmatpush.bf16.msra.mxu0 %v697
    %945 = vmatpush.bf16.msra.mxu0 %v689
    %946 = vmatpush.bf16.msra.mxu0 %v681
    %947 = vmatmul.bf16.gmra.mxu0 %v741
    %v948 = vpop.f32.mrf.mxu0
    %v949 = vadd.f32 %v936, %v948
    %v950 = vpop.f32.mrf.mxu0
    %951 = vdwg.mxu0
    %v952 = vld [vmem:[%s2] sm:$0xff]
    %v954 = vperm.slane %v952, 0
    %v955 = vperm.slane %v952, 1
    %v956 = vperm.slane %v952, 2
    %v957 = vperm.slane %v952, 3
    %v958 = vperm.slane %v952, 4
    %v959 = vperm.slane %v952, 5
    %v960 = vperm.slane %v952, 6
    %v961 = vperm.slane %v952, 7
    %v970 = vmul.f32 %v767, %v954
    %v971 = vmul.f32 %v793, %v955
    %v972 = vmul.f32 %v819, %v956
    %v973 = vmul.f32 %v845, %v957
    %v974 = vmul.f32 %v871, %v958
    %v975 = vmul.f32 %v897, %v959
    %v976 = vmul.f32 %v923, %v960
    %v977 = vmul.f32 %v949, %v961
    %v978 = vld [vmem:[%s3] sm:$0xff]
    %v980 = vperm.slane %v978, 0
    %v981 = vperm.slane %v978, 1
    %v982 = vperm.slane %v978, 2
    %v983 = vperm.slane %v978, 3
    %v984 = vperm.slane %v978, 4
    %v985 = vperm.slane %v978, 5
    %v986 = vperm.slane %v978, 6
    %v987 = vperm.slane %v978, 7
    %v996 = vadd.f32 %v970, %v980
    %v997 = vadd.f32 %v971, %v981
    %v998 = vadd.f32 %v972, %v982
    %v999 = vadd.f32 %v973, %v983
    %v1000 = vadd.f32 %v974, %v984
    %v1001 = vadd.f32 %v975, %v985
    %v1002 = vadd.f32 %v976, %v986
    %v1003 = vadd.f32 %v977, %v987
    %v1012 = vrot.slane %v997, 6
    %v1013 = vrot.slane %v998, 4
    %v1014 = vrot.slane %v999, 2
    %v1015 = vrot.slane %v1001, 6
    %v1016 = vrot.slane %v1002, 4
    %v1017 = vrot.slane %v1003, 2
    %vm1018 = vcmask 1041408
    %v1019 = vsel %vm1018, %v996, %v1012
    %vm1020 = vcmask 1045508
    %v1021 = vsel %vm1020, %v1013, %v1014
    %vm1022 = vcmask 1043456
    %v1023 = vsel %vm1022, %v1019, %v1021
    %v1024 = vsel %vm1018, %v1000, %v1015
    %v1025 = vsel %vm1020, %v1016, %v1017
    %v1026 = vsel %vm1022, %v1024, %v1025
    %1029 = vst [vmem:[%s4] sm:$0xff] %v1023
    %1030 = vst [vmem:[%s4 + $0x8] sm:$0xff] %v1026
    // Predicated region
    $region22: #{dis_decoder_linear_forward.3} parent=1 // pred_check
      _
    $region23: #{dis_decoder_linear_forward.3} parent=1 // pred_check_branch
      %1032 = sbr.rel (0) target = $region25
    $region24: #{dis_decoder_linear_forward.3} parent=1 // pred_region
      _
    $region25: #{dis_decoder_linear_forward.3} parent=1 // pred_fallthru
      _
    // Predicated region
    $region26: #{dis_decoder_linear_forward.3} parent=1 // pred_check
      _
    $region27: #{dis_decoder_linear_forward.3} parent=1 // pred_check_branch
      %1034 = sbr.rel (0) target = $region29
    $region28: #{dis_decoder_linear_forward.3} parent=1 // pred_region
      _
    $region29: #{dis_decoder_linear_forward.3} parent=1 // pred_fallthru
      _
    %1035 = vsyncpa [#allocation3], 1

// kernel: dis_decoder_linear_forward.2
$region0: #{dis_decoder_linear_forward.2}
  #allocation0 [shape = 'u32[]', space=smem, size = 0x4, offset = 0x4, fixed_abs, tag = 'smem constant byte address 0x4 - core index']
  #allocation1 [shape = 'u32[72,128]{1,0:T(1,128)}', space=vmem, size = 0x9000, scoped, tag = 'internal scratch']
  %s0 = inlined_call_operand.vmem [shape: f32[8,128], index: 0, kind: input, shape index: {}]
  %s1 = inlined_call_operand.hbm [shape: bf16[128,256], index: 1, kind: input, shape index: {}]
  %s2 = inlined_call_operand.hbm [shape: f32[1,256], index: 2, kind: input, shape index: {}]
  %s3 = inlined_call_operand.hbm [shape: bf16[6,256,256], index: 3, kind: input, shape index: {}]
  %s4 = inlined_call_operand.hbm [shape: f32[6,1,256], index: 4, kind: input, shape index: {}]
  %s5 = inlined_call_operand.hbm [shape: bf16[128,256], index: 5, kind: input, shape index: {}]
  %s6 = inlined_call_operand.vmem [shape: f32[8,256], index: 6, kind: output, shape index: {}]
  %s7 = sld [smem:[#allocation0]]
  $region54: #{dis_decoder_linear_forward.2} parent=0
    _
  %s9 = ssub.s32 1, %s7
  %s10 = scalar_select 0, %s9, %s7
  $region1: #{dis_decoder_linear_forward.2} parent=0
    #allocation2 [shape = 'u8[65536]{0}', space=vmem, size = 0x10000, scoped, tag = 'input window, operand 1, single buffered']
    #allocation3 [shape = 's32[1]{0}', space=sflag, size = 0x4, scoped, tag = 'scoped memory for dis_decoder_linear_forward.2']
    #allocation4 [shape = 'u8[1024]{0}', space=vmem, size = 0x400, scoped, tag = 'input window, operand 2, single buffered']
    #allocation5 [shape = 's32[1]{0}', space=sflag, size = 0x4, scoped, tag = 'scoped memory for dis_decoder_linear_forward.2']
    #allocation6 [shape = 'u8[786432]{0}', space=vmem, size = 0xc0000, scoped, tag = 'input window, operand 3, single buffered']
    #allocation7 [shape = 'u8[6144]{0}', space=vmem, size = 0x1800, scoped, tag = 'input window, operand 4, single buffered']
    #allocation8 [shape = 's32[1]{0}', space=sflag, size = 0x4, scoped, tag = 'scoped memory for dis_decoder_linear_forward.2']
    #allocation9 [shape = 'u8[65536]{0}', space=vmem, size = 0x10000, scoped, tag = 'input window, operand 5, single buffered']
    %11 = vsyncpa [#allocation3], 0
    %12 = vsyncpa [#allocation5], 0
    %13 = vsyncpa [#allocation8], 0
    // Predicated region
    $region2: #{dis_decoder_linear_forward.2} parent=1 // pred_check
      _
    $region3: #{dis_decoder_linear_forward.2} parent=1 // pred_check_branch
      %15 = sbr.rel (0) target = $region5
    $region4: #{dis_decoder_linear_forward.2} parent=1 // pred_region
      _
    $region5: #{dis_decoder_linear_forward.2} parent=1 // pred_fallthru
      _
    // Predicated region
    $region6: #{dis_decoder_linear_forward.2} parent=1 // pred_check
      _
    $region7: #{dis_decoder_linear_forward.2} parent=1 // pred_check_branch
      %17 = sbr.rel (0) target = $region9
    $region8: #{dis_decoder_linear_forward.2} parent=1 // pred_region
      %19 = vsyncadd [#allocation3], 0
      %s20 = sshll.u32 %s1, 4
      %s21 = int_to_ptr.hbm [resolvable:$true] %s20
      %s22 = sshll.u32 [#allocation2], 4
      %s23 = int_to_ptr.vmem [resolvable:$true] %s22
      %28 = dma.hbm_to_vmem [thread:$0]  %s21, 2048, %s23, [#allocation3], 128, 128, 8
    $region9: #{dis_decoder_linear_forward.2} parent=1 // pred_fallthru
      _
    // Predicated region
    $region10: #{dis_decoder_linear_forward.2} parent=1 // pred_check
      _
    $region11: #{dis_decoder_linear_forward.2} parent=1 // pred_check_branch
      %30 = sbr.rel (0) target = $region13
    $region12: #{dis_decoder_linear_forward.2} parent=1 // pred_region
      %32 = vsyncadd [#allocation5], 0
      %s34 = sshll.u32 %s2, 4
      %s35 = int_to_ptr.hbm [resolvable:$true] %s34
      %s36 = sshll.u32 [#allocation4], 4
      %s37 = int_to_ptr.vmem [resolvable:$true] %s36
      %39 = dma.hbm_to_vmem [thread:$0]  %s35, 32, %s37, [#allocation5]
    $region13: #{dis_decoder_linear_forward.2} parent=1 // pred_fallthru
      _
    // Predicated region
    $region14: #{dis_decoder_linear_forward.2} parent=1 // pred_check
      _
    $region15: #{dis_decoder_linear_forward.2} parent=1 // pred_check_branch
      %41 = sbr.rel (0) target = $region17
    $region16: #{dis_decoder_linear_forward.2} parent=1 // pred_region
      %43 = vsyncadd [#allocation5], 0
      %s44 = sshll.u32 %s3, 4
      %s45 = int_to_ptr.hbm [resolvable:$true] %s44
      %s46 = sshll.u32 [#allocation6], 4
      %s47 = int_to_ptr.vmem [resolvable:$true] %s46
      %52 = dma.hbm_to_vmem [thread:$0]  %s45, 24576, %s47, [#allocation5], 128, 128, 8
    $region17: #{dis_decoder_linear_forward.2} parent=1 // pred_fallthru
      _
    // Predicated region
    $region18: #{dis_decoder_linear_forward.2} parent=1 // pred_check
      _
    $region19: #{dis_decoder_linear_forward.2} parent=1 // pred_check_branch
      %54 = sbr.rel (0) target = $region21
    $region20: #{dis_decoder_linear_forward.2} parent=1 // pred_region
      %56 = vsyncadd [#allocation8], 0
      %s57 = sshll.u32 %s4, 4
      %s58 = int_to_ptr.hbm [resolvable:$true] %s57
      %s59 = sshll.u32 [#allocation7], 4
      %s60 = int_to_ptr.vmem [resolvable:$true] %s59
      %65 = dma.hbm_to_vmem [thread:$0]  %s58, 192, %s60, [#allocation8], 32, 32, 2
    $region21: #{dis_decoder_linear_forward.2} parent=1 // pred_fallthru
      _
    // Predicated region
    $region22: #{dis_decoder_linear_forward.2} parent=1 // pred_check
      _
    $region23: #{dis_decoder_linear_forward.2} parent=1 // pred_check_branch
      %67 = sbr.rel (0) target = $region25
    $region24: #{dis_decoder_linear_forward.2} parent=1 // pred_region
      %69 = vsyncadd [#allocation8], 0
      %s70 = sshll.u32 %s5, 4
      %s71 = int_to_ptr.hbm [resolvable:$true] %s70
      %s72 = sshll.u32 [#allocation9], 4
      %s73 = int_to_ptr.vmem [resolvable:$true] %s72
      %78 = dma.hbm_to_vmem [thread:$0]  %s71, 2048, %s73, [#allocation8], 128, 128, 8
    $region25: #{dis_decoder_linear_forward.2} parent=1 // pred_fallthru
      _
    // Predicated region
    $region26: #{dis_decoder_linear_forward.2} parent=1 // pred_check
      _
    $region27: #{dis_decoder_linear_forward.2} parent=1 // pred_check_branch
      %80 = sbr.rel (0) target = $region29
    $region28: #{dis_decoder_linear_forward.2} parent=1 // pred_region
      %82 = dma.done [#allocation3], 2048
    $region29: #{dis_decoder_linear_forward.2} parent=1 // pred_fallthru
      _
    // Predicated region
    $region30: #{dis_decoder_linear_forward.2} parent=1 // pred_check
      _
    $region31: #{dis_decoder_linear_forward.2} parent=1 // pred_check_branch
      %84 = sbr.rel (0) target = $region33
    $region32: #{dis_decoder_linear_forward.2} parent=1 // pred_region
      %86 = dma.done [#allocation5], 32
    $region33: #{dis_decoder_linear_forward.2} parent=1 // pred_fallthru
      _
    // Predicated region
    $region34: #{dis_decoder_linear_forward.2} parent=1 // pred_check
      _
    $region35: #{dis_decoder_linear_forward.2} parent=1 // pred_check_branch
      %88 = sbr.rel (0) target = $region37
    $region36: #{dis_decoder_linear_forward.2} parent=1 // pred_region
      %90 = dma.done [#allocation5], 24576
    $region37: #{dis_decoder_linear_forward.2} parent=1 // pred_fallthru
      _
    // Predicated region
    $region38: #{dis_decoder_linear_forward.2} parent=1 // pred_check
      _
    $region39: #{dis_decoder_linear_forward.2} parent=1 // pred_check_branch
      %92 = sbr.rel (0) target = $region41
    $region40: #{dis_decoder_linear_forward.2} parent=1 // pred_region
      %94 = dma.done [#allocation8], 192
    $region41: #{dis_decoder_linear_forward.2} parent=1 // pred_fallthru
      _
    // Predicated region
    $region42: #{dis_decoder_linear_forward.2} parent=1 // pred_check
      _
    $region43: #{dis_decoder_linear_forward.2} parent=1 // pred_check_branch
      %96 = sbr.rel (0) target = $region45
    $region44: #{dis_decoder_linear_forward.2} parent=1 // pred_region
      %98 = dma.done [#allocation8], 2048
    $region45: #{dis_decoder_linear_forward.2} parent=1 // pred_fallthru
      _
    %v99 = vld [vmem:[%s0] sm:$0xff]
    %v100 = vpack.c.bf16 %v99, %v99
    %v101 = vld [vmem:[#allocation2] sm:$0xff]
    %v102 = vld [vmem:[#allocation2 + $0x8] sm:$0xff]
    %v103 = vld [vmem:[#allocation2 + $0x10] sm:$0xff]
    %v104 = vld [vmem:[#allocation2 + $0x18] sm:$0xff]
    %v105 = vld [vmem:[#allocation2 + $0x20] sm:$0xff]
    %v106 = vld [vmem:[#allocation2 + $0x28] sm:$0xff]
    %v107 = vld [vmem:[#allocation2 + $0x30] sm:$0xff]
    %v108 = vld [vmem:[#allocation2 + $0x38] sm:$0xff]
    %v109 = vld [vmem:[#allocation2 + $0x40] sm:$0xff]
    %v110 = vld [vmem:[#allocation2 + $0x48] sm:$0xff]
    %v111 = vld [vmem:[#allocation2 + $0x50] sm:$0xff]
    %v112 = vld [vmem:[#allocation2 + $0x58] sm:$0xff]
    %v113 = vld [vmem:[#allocation2 + $0x60] sm:$0xff]
    %v114 = vld [vmem:[#allocation2 + $0x68] sm:$0xff]
    %v115 = vld [vmem:[#allocation2 + $0x70] sm:$0xff]
    %v116 = vld [vmem:[#allocation2 + $0x78] sm:$0xff]
    %v117 = vld [vmem:[#allocation4] sm:$0x3]
    %v119 = vperm.slane %v117, 0
    %v120 = vperm.slane %v117, 1
    %v139 = vunpack.c.l.b16 %v101
    %v140 = vunpack.c.h.b16 %v101
    %v141 = vunpack.c.l.b16 %v102
    %v142 = vunpack.c.h.b16 %v102
    %v143 = vunpack.c.l.b16 %v103
    %v144 = vunpack.c.h.b16 %v103
    %v145 = vunpack.c.l.b16 %v104
    %v146 = vunpack.c.h.b16 %v104
    %v147 = vunpack.c.l.b16 %v105
    %v148 = vunpack.c.h.b16 %v105
    %v149 = vunpack.c.l.b16 %v106
    %v150 = vunpack.c.h.b16 %v106
    %v151 = vunpack.c.l.b16 %v107
    %v152 = vunpack.c.h.b16 %v107
    %v153 = vunpack.c.l.b16 %v108
    %v154 = vunpack.c.h.b16 %v108
    %v155 = vunpack.c.l.b16 %v109
    %v156 = vunpack.c.h.b16 %v109
    %v157 = vunpack.c.l.b16 %v110
    %v158 = vunpack.c.h.b16 %v110
    %v159 = vunpack.c.l.b16 %v111
    %v160 = vunpack.c.h.b16 %v111
    %v161 = vunpack.c.l.b16 %v112
    %v162 = vunpack.c.h.b16 %v112
    %v163 = vunpack.c.l.b16 %v113
    %v164 = vunpack.c.h.b16 %v113
    %v165 = vunpack.c.l.b16 %v114
    %v166 = vunpack.c.h.b16 %v114
    %v167 = vunpack.c.l.b16 %v115
    %v168 = vunpack.c.h.b16 %v115
    %v169 = vunpack.c.l.b16 %v116
    %v170 = vunpack.c.h.b16 %v116
    %v171 = vpack.c.b16 %v141, %v139
    %v172 = vpack.c.b16 %v142, %v140
    %v173 = vpack.c.b16 %v145, %v143
    %v174 = vpack.c.b16 %v146, %v144
    %v175 = vpack.c.b16 %v149, %v147
    %v176 = vpack.c.b16 %v150, %v148
    %v177 = vpack.c.b16 %v153, %v151
    %v178 = vpack.c.b16 %v154, %v152
    %v179 = vpack.c.b16 %v157, %v155
    %v180 = vpack.c.b16 %v158, %v156
    %v181 = vpack.c.b16 %v161, %v159
    %v182 = vpack.c.b16 %v162, %v160
    %v183 = vpack.c.b16 %v165, %v163
    %v184 = vpack.c.b16 %v166, %v164
    %v185 = vpack.c.b16 %v169, %v167
    %v186 = vpack.c.b16 %v170, %v168
    %203 = vmatpush.bf16.msra.mxu0 %v185
    %204 = vmatpush.bf16.msra.mxu0 %v183
    %205 = vmatpush.bf16.msra.mxu0 %v181
    %206 = vmatpush.bf16.msra.mxu0 %v179
    %207 = vmatpush.bf16.msra.mxu0 %v177
    %208 = vmatpush.bf16.msra.mxu0 %v175
    %209 = vmatpush.bf16.msra.mxu0 %v173
    %210 = vmatpush.bf16.msra.mxu0 %v171
    %211 = vmatmul.bf16.gmra.mxu0 %v100
    %v212 = vpop.f32.mrf.mxu0
    %v213 = vadd.f32 %v119, %v212
    %v214 = vpop.f32.mrf.mxu0
    %215 = vdwg.mxu0
    %216 = vmatpush.bf16.msra.mxu0 %v186
    %217 = vmatpush.bf16.msra.mxu0 %v184
    %218 = vmatpush.bf16.msra.mxu0 %v182
    %219 = vmatpush.bf16.msra.mxu0 %v180
    %220 = vmatpush.bf16.msra.mxu0 %v178
    %221 = vmatpush.bf16.msra.mxu0 %v176
    %222 = vmatpush.bf16.msra.mxu0 %v174
    %223 = vmatpush.bf16.msra.mxu0 %v172
    %224 = vmatmul.bf16.gmra.mxu0 %v100
    %v225 = vpop.f32.mrf.mxu0
    %v226 = vadd.f32 %v120, %v225
    %v227 = vpop.f32.mrf.mxu0
    %228 = vdwg.mxu0
    %vm229 = vcmp.ge.f32.partialorder %v213, 0.0
    %vm230 = vcmp.ge.f32.partialorder %v226, 0.0
    %v231 = vmul.f32 %v213, 0.01
    %v232 = vmul.f32 %v226, 0.01
    %v233 = vsel %vm229, %v213, %v231
    %v234 = vsel %vm230, %v226, %v232
    %v235 = vpack.c.bf16 %v233, %v233
    %v236 = vpack.c.bf16 %v234, %v234
    %v237 = vld [vmem:[#allocation6] sm:$0xff]
    %v238 = vld [vmem:[#allocation6 + $0x8] sm:$0xff]
    %v239 = vld [vmem:[#allocation6 + $0x10] sm:$0xff]
    %v240 = vld [vmem:[#allocation6 + $0x18] sm:$0xff]
    %v241 = vld [vmem:[#allocation6 + $0x20] sm:$0xff]
    %v242 = vld [vmem:[#allocation6 + $0x28] sm:$0xff]
    %v243 = vld [vmem:[#allocation6 + $0x30] sm:$0xff]
    %v244 = vld [vmem:[#allocation6 + $0x38] sm:$0xff]
    %v245 = vld [vmem:[#allocation6 + $0x40] sm:$0xff]
    %v246 = vld [vmem:[#allocation6 + $0x48] sm:$0xff]
    %v247 = vld [vmem:[#allocation6 + $0x50] sm:$0xff]
    %v248 = vld [vmem:[#allocation6 + $0x58] sm:$0xff]
    %v249 = vld [vmem:[#allocation6 + $0x60] sm:$0xff]
    %v250 = vld [vmem:[#allocation6 + $0x68] sm:$0xff]
    %v251 = vld [vmem:[#allocation6 + $0x70] sm:$0xff]
    %v252 = vld [vmem:[#allocation6 + $0x78] sm:$0xff]
    %v253 = vld [vmem:[#allocation6 + $0x80] sm:$0xff]
    %v254 = vld [vmem:[#allocation6 + $0x88] sm:$0xff]
    %v255 = vld [vmem:[#allocation6 + $0x90] sm:$0xff]
    %v256 = vld [vmem:[#allocation6 + $0x98] sm:$0xff]
    %v257 = vld [vmem:[#allocation6 + $0xa0] sm:$0xff]
    %v258 = vld [vmem:[#allocation6 + $0xa8] sm:$0xff]
    %v259 = vld [vmem:[#allocation6 + $0xb0] sm:$0xff]
    %v260 = vld [vmem:[#allocation6 + $0xb8] sm:$0xff]
    %v261 = vld [vmem:[#allocation6 + $0xc0] sm:$0xff]
    %v262 = vld [vmem:[#allocation6 + $0xc8] sm:$0xff]
    %v263 = vld [vmem:[#allocation6 + $0xd0] sm:$0xff]
    %v264 = vld [vmem:[#allocation6 + $0xd8] sm:$0xff]
    %v265 = vld [vmem:[#allocation6 + $0xe0] sm:$0xff]
    %v266 = vld [vmem:[#allocation6 + $0xe8] sm:$0xff]
    %v267 = vld [vmem:[#allocation6 + $0xf0] sm:$0xff]
    %v268 = vld [vmem:[#allocation6 + $0xf8] sm:$0xff]
    %v269 = vld [vmem:[#allocation7] sm:$0x3]
    %v271 = vperm.slane %v269, 0
    %v272 = vperm.slane %v269, 1
    %v307 = vunpack.c.l.b16 %v237
    %v308 = vunpack.c.h.b16 %v237
    %v309 = vunpack.c.l.b16 %v238
    %v310 = vunpack.c.h.b16 %v238
    %v311 = vunpack.c.l.b16 %v239
    %v312 = vunpack.c.h.b16 %v239
    %v313 = vunpack.c.l.b16 %v240
    %v314 = vunpack.c.h.b16 %v240
    %v315 = vunpack.c.l.b16 %v241
    %v316 = vunpack.c.h.b16 %v241
    %v317 = vunpack.c.l.b16 %v242
    %v318 = vunpack.c.h.b16 %v242
    %v319 = vunpack.c.l.b16 %v243
    %v320 = vunpack.c.h.b16 %v243
    %v321 = vunpack.c.l.b16 %v244
    %v322 = vunpack.c.h.b16 %v244
    %v323 = vunpack.c.l.b16 %v245
    %v324 = vunpack.c.h.b16 %v245
    %v325 = vunpack.c.l.b16 %v246
    %v326 = vunpack.c.h.b16 %v246
    %v327 = vunpack.c.l.b16 %v247
    %v328 = vunpack.c.h.b16 %v247
    %v329 = vunpack.c.l.b16 %v248
    %v330 = vunpack.c.h.b16 %v248
    %v331 = vunpack.c.l.b16 %v249
    %v332 = vunpack.c.h.b16 %v249
    %v333 = vunpack.c.l.b16 %v250
    %v334 = vunpack.c.h.b16 %v250
    %v335 = vunpack.c.l.b16 %v251
    %v336 = vunpack.c.h.b16 %v251
    %v337 = vunpack.c.l.b16 %v252
    %v338 = vunpack.c.h.b16 %v252
    %v339 = vunpack.c.l.b16 %v253
    %v340 = vunpack.c.h.b16 %v253
    %v341 = vunpack.c.l.b16 %v254
    %v342 = vunpack.c.h.b16 %v254
    %v343 = vunpack.c.l.b16 %v255
    %v344 = vunpack.c.h.b16 %v255
    %v345 = vunpack.c.l.b16 %v256
    %v346 = vunpack.c.h.b16 %v256
    %v347 = vunpack.c.l.b16 %v257
    %v348 = vunpack.c.h.b16 %v257
    %v349 = vunpack.c.l.b16 %v258
    %v350 = vunpack.c.h.b16 %v258
    %v351 = vunpack.c.l.b16 %v259
    %v352 = vunpack.c.h.b16 %v259
    %v353 = vunpack.c.l.b16 %v260
    %v354 = vunpack.c.h.b16 %v260
    %v355 = vunpack.c.l.b16 %v261
    %v356 = vunpack.c.h.b16 %v261
    %v357 = vunpack.c.l.b16 %v262
    %v358 = vunpack.c.h.b16 %v262
    %v359 = vunpack.c.l.b16 %v263
    %v360 = vunpack.c.h.b16 %v263
    %v361 = vunpack.c.l.b16 %v264
    %v362 = vunpack.c.h.b16 %v264
    %v363 = vunpack.c.l.b16 %v265
    %v364 = vunpack.c.h.b16 %v265
    %v365 = vunpack.c.l.b16 %v266
    %v366 = vunpack.c.h.b16 %v266
    %v367 = vunpack.c.l.b16 %v267
    %v368 = vunpack.c.h.b16 %v267
    %v369 = vunpack.c.l.b16 %v268
    %v370 = vunpack.c.h.b16 %v268
    %v371 = vpack.c.b16 %v309, %v307
    %v372 = vpack.c.b16 %v310, %v308
    %v373 = vpack.c.b16 %v313, %v311
    %v374 = vpack.c.b16 %v314, %v312
    %v375 = vpack.c.b16 %v317, %v315
    %v376 = vpack.c.b16 %v318, %v316
    %v377 = vpack.c.b16 %v321, %v319
    %v378 = vpack.c.b16 %v322, %v320
    %v379 = vpack.c.b16 %v325, %v323
    %v380 = vpack.c.b16 %v326, %v324
    %v381 = vpack.c.b16 %v329, %v327
    %v382 = vpack.c.b16 %v330, %v328
    %v383 = vpack.c.b16 %v333, %v331
    %v384 = vpack.c.b16 %v334, %v332
    %v385 = vpack.c.b16 %v337, %v335
    %v386 = vpack.c.b16 %v338, %v336
    %v387 = vpack.c.b16 %v341, %v339
    %v388 = vpack.c.b16 %v342, %v340
    %v389 = vpack.c.b16 %v345, %v343
    %v390 = vpack.c.b16 %v346, %v344
    %v391 = vpack.c.b16 %v349, %v347
    %v392 = vpack.c.b16 %v350, %v348
    %v393 = vpack.c.b16 %v353, %v351
    %v394 = vpack.c.b16 %v354, %v352
    %v395 = vpack.c.b16 %v357, %v355
    %v396 = vpack.c.b16 %v358, %v356
    %v397 = vpack.c.b16 %v361, %v359
    %v398 = vpack.c.b16 %v362, %v360
    %v399 = vpack.c.b16 %v365, %v363
    %v400 = vpack.c.b16 %v366, %v364
    %v401 = vpack.c.b16 %v369, %v367
    %v402 = vpack.c.b16 %v370, %v368
    %435 = vmatpush.bf16.msra.mxu0 %v385
    %436 = vmatpush.bf16.msra.mxu0 %v383
    %437 = vmatpush.bf16.msra.mxu0 %v381
    %438 = vmatpush.bf16.msra.mxu0 %v379
    %439 = vmatpush.bf16.msra.mxu0 %v377
    %440 = vmatpush.bf16.msra.mxu0 %v375
    %441 = vmatpush.bf16.msra.mxu0 %v373
    %442 = vmatpush.bf16.msra.mxu0 %v371
    %443 = vmatmul.bf16.gmra.mxu0 %v235
    %v444 = vpop.f32.mrf.mxu0
    %v445 = vadd.f32 %v271, %v444
    %v446 = vpop.f32.mrf.mxu0
    %447 = vdwg.mxu0
    %448 = vmatpush.bf16.msra.mxu0 %v401
    %449 = vmatpush.bf16.msra.mxu0 %v399
    %450 = vmatpush.bf16.msra.mxu0 %v397
    %451 = vmatpush.bf16.msra.mxu0 %v395
    %452 = vmatpush.bf16.msra.mxu0 %v393
    %453 = vmatpush.bf16.msra.mxu0 %v391
    %454 = vmatpush.bf16.msra.mxu0 %v389
    %455 = vmatpush.bf16.msra.mxu0 %v387
    %456 = vmatmul.bf16.gmra.mxu0 %v236
    %v457 = vpop.f32.mrf.mxu0
    %v458 = vadd.f32 %v445, %v457
    %v459 = vpop.f32.mrf.mxu0
    %460 = vdwg.mxu0
    %461 = vmatpush.bf16.msra.mxu0 %v386
    %462 = vmatpush.bf16.msra.mxu0 %v384
    %463 = vmatpush.bf16.msra.mxu0 %v382
    %464 = vmatpush.bf16.msra.mxu0 %v380
    %465 = vmatpush.bf16.msra.mxu0 %v378
    %466 = vmatpush.bf16.msra.mxu0 %v376
    %467 = vmatpush.bf16.msra.mxu0 %v374
    %468 = vmatpush.bf16.msra.mxu0 %v372
    %469 = vmatmul.bf16.gmra.mxu0 %v235
    %v470 = vpop.f32.mrf.mxu0
    %v471 = vadd.f32 %v272, %v470
    %v472 = vpop.f32.mrf.mxu0
    %473 = vdwg.mxu0
    %474 = vmatpush.bf16.msra.mxu0 %v402
    %475 = vmatpush.bf16.msra.mxu0 %v400
    %476 = vmatpush.bf16.msra.mxu0 %v398
    %477 = vmatpush.bf16.msra.mxu0 %v396
    %478 = vmatpush.bf16.msra.mxu0 %v394
    %479 = vmatpush.bf16.msra.mxu0 %v392
    %480 = vmatpush.bf16.msra.mxu0 %v390
    %481 = vmatpush.bf16.msra.mxu0 %v388
    %482 = vmatmul.bf16.gmra.mxu0 %v236
    %v483 = vpop.f32.mrf.mxu0
    %v484 = vadd.f32 %v471, %v483
    %v485 = vpop.f32.mrf.mxu0
    %486 = vdwg.mxu0
    %vm487 = vcmp.ge.f32.partialorder %v458, 0.0
    %vm488 = vcmp.ge.f32.partialorder %v484, 0.0
    %v489 = vmul.f32 %v458, 0.01
    %v490 = vmul.f32 %v484, 0.01
    %v491 = vsel %vm487, %v458, %v489
    %v492 = vsel %vm488, %v484, %v490
    %v493 = vpack.c.bf16 %v491, %v491
    %v494 = vpack.c.bf16 %v492, %v492
    %s495 = scalar_lea.vmem [#allocation6], 256
    %v496 = vld [vmem:[%s495] sm:$0xff]
    %v497 = vld [vmem:[%s495 + $0x8] sm:$0xff]
    %v498 = vld [vmem:[%s495 + $0x10] sm:$0xff]
    %v499 = vld [vmem:[%s495 + $0x18] sm:$0xff]
    %v500 = vld [vmem:[%s495 + $0x20] sm:$0xff]
    %v501 = vld [vmem:[%s495 + $0x28] sm:$0xff]
    %v502 = vld [vmem:[%s495 + $0x30] sm:$0xff]
    %v503 = vld [vmem:[%s495 + $0x38] sm:$0xff]
    %v504 = vld [vmem:[%s495 + $0x40] sm:$0xff]
    %v505 = vld [vmem:[%s495 + $0x48] sm:$0xff]
    %v506 = vld [vmem:[%s495 + $0x50] sm:$0xff]
    %v507 = vld [vmem:[%s495 + $0x58] sm:$0xff]
    %v508 = vld [vmem:[%s495 + $0x60] sm:$0xff]
    %v509 = vld [vmem:[%s495 + $0x68] sm:$0xff]
    %v510 = vld [vmem:[%s495 + $0x70] sm:$0xff]
    %v511 = vld [vmem:[%s495 + $0x78] sm:$0xff]
    %v512 = vld [vmem:[%s495 + $0x80] sm:$0xff]
    %v513 = vld [vmem:[%s495 + $0x88] sm:$0xff]
    %v514 = vld [vmem:[%s495 + $0x90] sm:$0xff]
    %v515 = vld [vmem:[%s495 + $0x98] sm:$0xff]
    %v516 = vld [vmem:[%s495 + $0xa0] sm:$0xff]
    %v517 = vld [vmem:[%s495 + $0xa8] sm:$0xff]
    %v518 = vld [vmem:[%s495 + $0xb0] sm:$0xff]
    %v519 = vld [vmem:[%s495 + $0xb8] sm:$0xff]
    %v520 = vld [vmem:[%s495 + $0xc0] sm:$0xff]
    %v521 = vld [vmem:[%s495 + $0xc8] sm:$0xff]
    %v522 = vld [vmem:[%s495 + $0xd0] sm:$0xff]
    %v523 = vld [vmem:[%s495 + $0xd8] sm:$0xff]
    %v524 = vld [vmem:[%s495 + $0xe0] sm:$0xff]
    %v525 = vld [vmem:[%s495 + $0xe8] sm:$0xff]
    %v526 = vld [vmem:[%s495 + $0xf0] sm:$0xff]
    %v527 = vld [vmem:[%s495 + $0xf8] sm:$0xff]
    %s528 = scalar_lea.vmem [#allocation7], 2
    %v529 = vld [vmem:[%s528] sm:$0x3]
    %v531 = vperm.slane %v529, 0
    %v532 = vperm.slane %v529, 1
    %v567 = vunpack.c.l.b16 %v496
    %v568 = vunpack.c.h.b16 %v496
    %v569 = vunpack.c.l.b16 %v497
    %v570 = vunpack.c.h.b16 %v497
    %v571 = vunpack.c.l.b16 %v498
    %v572 = vunpack.c.h.b16 %v498
    %v573 = vunpack.c.l.b16 %v499
    %v574 = vunpack.c.h.b16 %v499
    %v575 = vunpack.c.l.b16 %v500
    %v576 = vunpack.c.h.b16 %v500
    %v577 = vunpack.c.l.b16 %v501
    %v578 = vunpack.c.h.b16 %v501
    %v579 = vunpack.c.l.b16 %v502
    %v580 = vunpack.c.h.b16 %v502
    %v581 = vunpack.c.l.b16 %v503
    %v582 = vunpack.c.h.b16 %v503
    %v583 = vunpack.c.l.b16 %v504
    %v584 = vunpack.c.h.b16 %v504
    %v585 = vunpack.c.l.b16 %v505
    %v586 = vunpack.c.h.b16 %v505
    %v587 = vunpack.c.l.b16 %v506
    %v588 = vunpack.c.h.b16 %v506
    %v589 = vunpack.c.l.b16 %v507
    %v590 = vunpack.c.h.b16 %v507
    %v591 = vunpack.c.l.b16 %v508
    %v592 = vunpack.c.h.b16 %v508
    %v593 = vunpack.c.l.b16 %v509
    %v594 = vunpack.c.h.b16 %v509
    %v595 = vunpack.c.l.b16 %v510
    %v596 = vunpack.c.h.b16 %v510
    %v597 = vunpack.c.l.b16 %v511
    %v598 = vunpack.c.h.b16 %v511
    %v599 = vunpack.c.l.b16 %v512
    %v600 = vunpack.c.h.b16 %v512
    %v601 = vunpack.c.l.b16 %v513
    %v602 = vunpack.c.h.b16 %v513
    %v603 = vunpack.c.l.b16 %v514
    %v604 = vunpack.c.h.b16 %v514
    %v605 = vunpack.c.l.b16 %v515
    %v606 = vunpack.c.h.b16 %v515
    %v607 = vunpack.c.l.b16 %v516
    %v608 = vunpack.c.h.b16 %v516
    %v609 = vunpack.c.l.b16 %v517
    %v610 = vunpack.c.h.b16 %v517
    %v611 = vunpack.c.l.b16 %v518
    %v612 = vunpack.c.h.b16 %v518
    %v613 = vunpack.c.l.b16 %v519
    %v614 = vunpack.c.h.b16 %v519
    %v615 = vunpack.c.l.b16 %v520
    %v616 = vunpack.c.h.b16 %v520
    %v617 = vunpack.c.l.b16 %v521
    %v618 = vunpack.c.h.b16 %v521
    %v619 = vunpack.c.l.b16 %v522
    %v620 = vunpack.c.h.b16 %v522
    %v621 = vunpack.c.l.b16 %v523
    %v622 = vunpack.c.h.b16 %v523
    %v623 = vunpack.c.l.b16 %v524
    %v624 = vunpack.c.h.b16 %v524
    %v625 = vunpack.c.l.b16 %v525
    %v626 = vunpack.c.h.b16 %v525
    %v627 = vunpack.c.l.b16 %v526
    %v628 = vunpack.c.h.b16 %v526
    %v629 = vunpack.c.l.b16 %v527
    %v630 = vunpack.c.h.b16 %v527
    %v631 = vpack.c.b16 %v569, %v567
    %v632 = vpack.c.b16 %v570, %v568
    %v633 = vpack.c.b16 %v573, %v571
    %v634 = vpack.c.b16 %v574, %v572
    %v635 = vpack.c.b16 %v577, %v575
    %v636 = vpack.c.b16 %v578, %v576
    %v637 = vpack.c.b16 %v581, %v579
    %v638 = vpack.c.b16 %v582, %v580
    %v639 = vpack.c.b16 %v585, %v583
    %v640 = vpack.c.b16 %v586, %v584
    %v641 = vpack.c.b16 %v589, %v587
    %v642 = vpack.c.b16 %v590, %v588
    %v643 = vpack.c.b16 %v593, %v591
    %v644 = vpack.c.b16 %v594, %v592
    %v645 = vpack.c.b16 %v597, %v595
    %v646 = vpack.c.b16 %v598, %v596
    %v647 = vpack.c.b16 %v601, %v599
    %v648 = vpack.c.b16 %v602, %v600
    %v649 = vpack.c.b16 %v605, %v603
    %v650 = vpack.c.b16 %v606, %v604
    %v651 = vpack.c.b16 %v609, %v607
    %v652 = vpack.c.b16 %v610, %v608
    %v653 = vpack.c.b16 %v613, %v611
    %v654 = vpack.c.b16 %v614, %v612
    %v655 = vpack.c.b16 %v617, %v615
    %v656 = vpack.c.b16 %v618, %v616
    %v657 = vpack.c.b16 %v621, %v619
    %v658 = vpack.c.b16 %v622, %v620
    %v659 = vpack.c.b16 %v625, %v623
    %v660 = vpack.c.b16 %v626, %v624
    %v661 = vpack.c.b16 %v629, %v627
    %v662 = vpack.c.b16 %v630, %v628
    %695 = vmatpush.bf16.msra.mxu0 %v645
    %696 = vmatpush.bf16.msra.mxu0 %v643
    %697 = vmatpush.bf16.msra.mxu0 %v641
    %698 = vmatpush.bf16.msra.mxu0 %v639
    %699 = vmatpush.bf16.msra.mxu0 %v637
    %700 = vmatpush.bf16.msra.mxu0 %v635
    %701 = vmatpush.bf16.msra.mxu0 %v633
    %702 = vmatpush.bf16.msra.mxu0 %v631
    %703 = vmatmul.bf16.gmra.mxu0 %v493
    %v704 = vpop.f32.mrf.mxu0
    %v705 = vadd.f32 %v531, %v704
    %v706 = vpop.f32.mrf.mxu0
    %707 = vdwg.mxu0
    %708 = vmatpush.bf16.msra.mxu0 %v661
    %709 = vmatpush.bf16.msra.mxu0 %v659
    %710 = vmatpush.bf16.msra.mxu0 %v657
    %711 = vmatpush.bf16.msra.mxu0 %v655
    %712 = vmatpush.bf16.msra.mxu0 %v653
    %713 = vmatpush.bf16.msra.mxu0 %v651
    %714 = vmatpush.bf16.msra.mxu0 %v649
    %715 = vmatpush.bf16.msra.mxu0 %v647
    %716 = vmatmul.bf16.gmra.mxu0 %v494
    %v717 = vpop.f32.mrf.mxu0
    %v718 = vadd.f32 %v705, %v717
    %v719 = vpop.f32.mrf.mxu0
    %720 = vdwg.mxu0
    %721 = vmatpush.bf16.msra.mxu0 %v646
    %722 = vmatpush.bf16.msra.mxu0 %v644
    %723 = vmatpush.bf16.msra.mxu0 %v642
    %724 = vmatpush.bf16.msra.mxu0 %v640
    %725 = vmatpush.bf16.msra.mxu0 %v638
    %726 = vmatpush.bf16.msra.mxu0 %v636
    %727 = vmatpush.bf16.msra.mxu0 %v634
    %728 = vmatpush.bf16.msra.mxu0 %v632
    %729 = vmatmul.bf16.gmra.mxu0 %v493
    %v730 = vpop.f32.mrf.mxu0
    %v731 = vadd.f32 %v532, %v730
    %v732 = vpop.f32.mrf.mxu0
    %733 = vdwg.mxu0
    %734 = vmatpush.bf16.msra.mxu0 %v662
    %735 = vmatpush.bf16.msra.mxu0 %v660
    %736 = vmatpush.bf16.msra.mxu0 %v658
    %737 = vmatpush.bf16.msra.mxu0 %v656
    %738 = vmatpush.bf16.msra.mxu0 %v654
    %739 = vmatpush.bf16.msra.mxu0 %v652
    %740 = vmatpush.bf16.msra.mxu0 %v650
    %741 = vmatpush.bf16.msra.mxu0 %v648
    %742 = vmatmul.bf16.gmra.mxu0 %v494
    %v743 = vpop.f32.mrf.mxu0
    %v744 = vadd.f32 %v731, %v743
    %v745 = vpop.f32.mrf.mxu0
    %746 = vdwg.mxu0
    %vm747 = vcmp.ge.f32.partialorder %v718, 0.0
    %vm748 = vcmp.ge.f32.partialorder %v744, 0.0
    %v749 = vmul.f32 %v718, 0.01
    %v750 = vmul.f32 %v744, 0.01
    %v751 = vsel %vm747, %v718, %v749
    %v752 = vsel %vm748, %v744, %v750
    %v753 = vpack.c.bf16 %v751, %v751
    %v754 = vpack.c.bf16 %v752, %v752
    %s755 = scalar_lea.vmem [#allocation6], 512
    %v756 = vld [vmem:[%s755] sm:$0xff]
    %v757 = vld [vmem:[%s755 + $0x8] sm:$0xff]
    %v758 = vld [vmem:[%s755 + $0x10] sm:$0xff]
    %v759 = vld [vmem:[%s755 + $0x18] sm:$0xff]
    %v760 = vld [vmem:[%s755 + $0x20] sm:$0xff]
    %v761 = vld [vmem:[%s755 + $0x28] sm:$0xff]
    %v762 = vld [vmem:[%s755 + $0x30] sm:$0xff]
    %v763 = vld [vmem:[%s755 + $0x38] sm:$0xff]
    %v764 = vld [vmem:[%s755 + $0x40] sm:$0xff]
    %v765 = vld [vmem:[%s755 + $0x48] sm:$0xff]
    %v766 = vld [vmem:[%s755 + $0x50] sm:$0xff]
    %v767 = vld [vmem:[%s755 + $0x58] sm:$0xff]
    %v768 = vld [vmem:[%s755 + $0x60] sm:$0xff]
    %v769 = vld [vmem:[%s755 + $0x68] sm:$0xff]
    %v770 = vld [vmem:[%s755 + $0x70] sm:$0xff]
    %v771 = vld [vmem:[%s755 + $0x78] sm:$0xff]
    %v772 = vld [vmem:[%s755 + $0x80] sm:$0xff]
    %v773 = vld [vmem:[%s755 + $0x88] sm:$0xff]
    %v774 = vld [vmem:[%s755 + $0x90] sm:$0xff]
    %v775 = vld [vmem:[%s755 + $0x98] sm:$0xff]
    %v776 = vld [vmem:[%s755 + $0xa0] sm:$0xff]
    %v777 = vld [vmem:[%s755 + $0xa8] sm:$0xff]
    %v778 = vld [vmem:[%s755 + $0xb0] sm:$0xff]
    %v779 = vld [vmem:[%s755 + $0xb8] sm:$0xff]
    %v780 = vld [vmem:[%s755 + $0xc0] sm:$0xff]
    %v781 = vld [vmem:[%s755 + $0xc8] sm:$0xff]
    %v782 = vld [vmem:[%s755 + $0xd0] sm:$0xff]
    %v783 = vld [vmem:[%s755 + $0xd8] sm:$0xff]
    %v784 = vld [vmem:[%s755 + $0xe0] sm:$0xff]
    %v785 = vld [vmem:[%s755 + $0xe8] sm:$0xff]
    %v786 = vld [vmem:[%s755 + $0xf0] sm:$0xff]
    %v787 = vld [vmem:[%s755 + $0xf8] sm:$0xff]
    %v788 = vld [vmem:[#allocation9] sm:$0xff]
    %v789 = vld [vmem:[#allocation9 + $0x8] sm:$0xff]
    %v790 = vld [vmem:[#allocation9 + $0x10] sm:$0xff]
    %v791 = vld [vmem:[#allocation9 + $0x18] sm:$0xff]
    %v792 = vld [vmem:[#allocation9 + $0x20] sm:$0xff]
    %v793 = vld [vmem:[#allocation9 + $0x28] sm:$0xff]
    %v794 = vld [vmem:[#allocation9 + $0x30] sm:$0xff]
    %v795 = vld [vmem:[#allocation9 + $0x38] sm:$0xff]
    %v796 = vld [vmem:[#allocation9 + $0x40] sm:$0xff]
    %v797 = vld [vmem:[#allocation9 + $0x48] sm:$0xff]
    %v798 = vld [vmem:[#allocation9 + $0x50] sm:$0xff]
    %v799 = vld [vmem:[#allocation9 + $0x58] sm:$0xff]
    %v800 = vld [vmem:[#allocation9 + $0x60] sm:$0xff]
    %v801 = vld [vmem:[#allocation9 + $0x68] sm:$0xff]
    %v802 = vld [vmem:[#allocation9 + $0x70] sm:$0xff]
    %v803 = vld [vmem:[#allocation9 + $0x78] sm:$0xff]
    %v820 = vunpack.c.l.b16 %v788
    %v821 = vunpack.c.h.b16 %v788
    %v822 = vunpack.c.l.b16 %v789
    %v823 = vunpack.c.h.b16 %v789
    %v824 = vunpack.c.l.b16 %v790
    %v825 = vunpack.c.h.b16 %v790
    %v826 = vunpack.c.l.b16 %v791
    %v827 = vunpack.c.h.b16 %v791
    %v828 = vunpack.c.l.b16 %v792
    %v829 = vunpack.c.h.b16 %v792
    %v830 = vunpack.c.l.b16 %v793
    %v831 = vunpack.c.h.b16 %v793
    %v832 = vunpack.c.l.b16 %v794
    %v833 = vunpack.c.h.b16 %v794
    %v834 = vunpack.c.l.b16 %v795
    %v835 = vunpack.c.h.b16 %v795
    %v836 = vunpack.c.l.b16 %v796
    %v837 = vunpack.c.h.b16 %v796
    %v838 = vunpack.c.l.b16 %v797
    %v839 = vunpack.c.h.b16 %v797
    %v840 = vunpack.c.l.b16 %v798
    %v841 = vunpack.c.h.b16 %v798
    %v842 = vunpack.c.l.b16 %v799
    %v843 = vunpack.c.h.b16 %v799
    %v844 = vunpack.c.l.b16 %v800
    %v845 = vunpack.c.h.b16 %v800
    %v846 = vunpack.c.l.b16 %v801
    %v847 = vunpack.c.h.b16 %v801
    %v848 = vunpack.c.l.b16 %v802
    %v849 = vunpack.c.h.b16 %v802
    %v850 = vunpack.c.l.b16 %v803
    %v851 = vunpack.c.h.b16 %v803
    %v852 = vpack.c.b16 %v822, %v820
    %v853 = vpack.c.b16 %v823, %v821
    %v854 = vpack.c.b16 %v826, %v824
    %v855 = vpack.c.b16 %v827, %v825
    %v856 = vpack.c.b16 %v830, %v828
    %v857 = vpack.c.b16 %v831, %v829
    %v858 = vpack.c.b16 %v834, %v832
    %v859 = vpack.c.b16 %v835, %v833
    %v860 = vpack.c.b16 %v838, %v836
    %v861 = vpack.c.b16 %v839, %v837
    %v862 = vpack.c.b16 %v842, %v840
    %v863 = vpack.c.b16 %v843, %v841
    %v864 = vpack.c.b16 %v846, %v844
    %v865 = vpack.c.b16 %v847, %v845
    %v866 = vpack.c.b16 %v850, %v848
    %v867 = vpack.c.b16 %v851, %v849
    %884 = vmatpush.bf16.msra.mxu0 %v866
    %885 = vmatpush.bf16.msra.mxu0 %v864
    %886 = vmatpush.bf16.msra.mxu0 %v862
    %887 = vmatpush.bf16.msra.mxu0 %v860
    %888 = vmatpush.bf16.msra.mxu0 %v858
    %889 = vmatpush.bf16.msra.mxu0 %v856
    %890 = vmatpush.bf16.msra.mxu0 %v854
    %891 = vmatpush.bf16.msra.mxu0 %v852
    %892 = vmatmul.bf16.gmra.mxu0 %v100
    %v893 = vpop.f32.mrf.mxu0
    %v894 = vadd.f32 0.0, %v893
    %v895 = vpop.f32.mrf.mxu0
    %896 = vdwg.mxu0
    %897 = vmatpush.bf16.msra.mxu0 %v867
    %898 = vmatpush.bf16.msra.mxu0 %v865
    %899 = vmatpush.bf16.msra.mxu0 %v863
    %900 = vmatpush.bf16.msra.mxu0 %v861
    %901 = vmatpush.bf16.msra.mxu0 %v859
    %902 = vmatpush.bf16.msra.mxu0 %v857
    %903 = vmatpush.bf16.msra.mxu0 %v855
    %904 = vmatpush.bf16.msra.mxu0 %v853
    %905 = vmatmul.bf16.gmra.mxu0 %v100
    %v906 = vpop.f32.mrf.mxu0
    %v907 = vadd.f32 0.0, %v906
    %v908 = vpop.f32.mrf.mxu0
    %909 = vdwg.mxu0
    %v942 = vunpack.c.l.b16 %v756
    %v943 = vunpack.c.h.b16 %v756
    %v944 = vunpack.c.l.b16 %v757
    %v945 = vunpack.c.h.b16 %v757
    %v946 = vunpack.c.l.b16 %v758
    %v947 = vunpack.c.h.b16 %v758
    %v948 = vunpack.c.l.b16 %v759
    %v949 = vunpack.c.h.b16 %v759
    %v950 = vunpack.c.l.b16 %v760
    %v951 = vunpack.c.h.b16 %v760
    %v952 = vunpack.c.l.b16 %v761
    %v953 = vunpack.c.h.b16 %v761
    %v954 = vunpack.c.l.b16 %v762
    %v955 = vunpack.c.h.b16 %v762
    %v956 = vunpack.c.l.b16 %v763
    %v957 = vunpack.c.h.b16 %v763
    %v958 = vunpack.c.l.b16 %v764
    %v959 = vunpack.c.h.b16 %v764
    %v960 = vunpack.c.l.b16 %v765
    %v961 = vunpack.c.h.b16 %v765
    %v962 = vunpack.c.l.b16 %v766
    %v963 = vunpack.c.h.b16 %v766
    %v964 = vunpack.c.l.b16 %v767
    %v965 = vunpack.c.h.b16 %v767
    %v966 = vunpack.c.l.b16 %v768
    %v967 = vunpack.c.h.b16 %v768
    %v968 = vunpack.c.l.b16 %v769
    %v969 = vunpack.c.h.b16 %v769
    %v970 = vunpack.c.l.b16 %v770
    %v971 = vunpack.c.h.b16 %v770
    %v972 = vunpack.c.l.b16 %v771
    %v973 = vunpack.c.h.b16 %v771
    %v974 = vunpack.c.l.b16 %v772
    %v975 = vunpack.c.h.b16 %v772
    %v976 = vunpack.c.l.b16 %v773
    %v977 = vunpack.c.h.b16 %v773
    %v978 = vunpack.c.l.b16 %v774
    %v979 = vunpack.c.h.b16 %v774
    %v980 = vunpack.c.l.b16 %v775
    %v981 = vunpack.c.h.b16 %v775
    %v982 = vunpack.c.l.b16 %v776
    %v983 = vunpack.c.h.b16 %v776
    %v984 = vunpack.c.l.b16 %v777
    %v985 = vunpack.c.h.b16 %v777
    %v986 = vunpack.c.l.b16 %v778
    %v987 = vunpack.c.h.b16 %v778
    %v988 = vunpack.c.l.b16 %v779
    %v989 = vunpack.c.h.b16 %v779
    %v990 = vunpack.c.l.b16 %v780
    %v991 = vunpack.c.h.b16 %v780
    %v992 = vunpack.c.l.b16 %v781
    %v993 = vunpack.c.h.b16 %v781
    %v994 = vunpack.c.l.b16 %v782
    %v995 = vunpack.c.h.b16 %v782
    %v996 = vunpack.c.l.b16 %v783
    %v997 = vunpack.c.h.b16 %v783
    %v998 = vunpack.c.l.b16 %v784
    %v999 = vunpack.c.h.b16 %v784
    %v1000 = vunpack.c.l.b16 %v785
    %v1001 = vunpack.c.h.b16 %v785
    %v1002 = vunpack.c.l.b16 %v786
    %v1003 = vunpack.c.h.b16 %v786
    %v1004 = vunpack.c.l.b16 %v787
    %v1005 = vunpack.c.h.b16 %v787
    %v1006 = vpack.c.b16 %v944, %v942
    %v1007 = vpack.c.b16 %v945, %v943
    %v1008 = vpack.c.b16 %v948, %v946
    %v1009 = vpack.c.b16 %v949, %v947
    %v1010 = vpack.c.b16 %v952, %v950
    %v1011 = vpack.c.b16 %v953, %v951
    %v1012 = vpack.c.b16 %v956, %v954
    %v1013 = vpack.c.b16 %v957, %v955
    %v1014 = vpack.c.b16 %v960, %v958
    %v1015 = vpack.c.b16 %v961, %v959
    %v1016 = vpack.c.b16 %v964, %v962
    %v1017 = vpack.c.b16 %v965, %v963
    %v1018 = vpack.c.b16 %v968, %v966
    %v1019 = vpack.c.b16 %v969, %v967
    %v1020 = vpack.c.b16 %v972, %v970
    %v1021 = vpack.c.b16 %v973, %v971
    %v1022 = vpack.c.b16 %v976, %v974
    %v1023 = vpack.c.b16 %v977, %v975
    %v1024 = vpack.c.b16 %v980, %v978
    %v1025 = vpack.c.b16 %v981, %v979
    %v1026 = vpack.c.b16 %v984, %v982
    %v1027 = vpack.c.b16 %v985, %v983
    %v1028 = vpack.c.b16 %v988, %v986
    %v1029 = vpack.c.b16 %v989, %v987
    %v1030 = vpack.c.b16 %v992, %v990
    %v1031 = vpack.c.b16 %v993, %v991
    %v1032 = vpack.c.b16 %v996, %v994
    %v1033 = vpack.c.b16 %v997, %v995
    %v1034 = vpack.c.b16 %v1000, %v998
    %v1035 = vpack.c.b16 %v1001, %v999
    %v1036 = vpack.c.b16 %v1004, %v1002
    %v1037 = vpack.c.b16 %v1005, %v1003
    %1070 = vmatpush.bf16.msra.mxu0 %v1020
    %1071 = vmatpush.bf16.msra.mxu0 %v1018
    %1072 = vmatpush.bf16.msra.mxu0 %v1016
    %1073 = vmatpush.bf16.msra.mxu0 %v1014
    %1074 = vmatpush.bf16.msra.mxu0 %v1012
    %1075 = vmatpush.bf16.msra.mxu0 %v1010
    %1076 = vmatpush.bf16.msra.mxu0 %v1008
    %1077 = vmatpush.bf16.msra.mxu0 %v1006
    %1078 = vmatmul.bf16.gmra.mxu0 %v753
    %v1079 = vpop.f32.mrf.mxu0
    %v1080 = vadd.f32 %v894, %v1079
    %v1081 = vpop.f32.mrf.mxu0
    %1082 = vdwg.mxu0
    %1083 = vmatpush.bf16.msra.mxu0 %v1036
    %1084 = vmatpush.bf16.msra.mxu0 %v1034
    %1085 = vmatpush.bf16.msra.mxu0 %v1032
    %1086 = vmatpush.bf16.msra.mxu0 %v1030
    %1087 = vmatpush.bf16.msra.mxu0 %v1028
    %1088 = vmatpush.bf16.msra.mxu0 %v1026
    %1089 = vmatpush.bf16.msra.mxu0 %v1024
    %1090 = vmatpush.bf16.msra.mxu0 %v1022
    %1091 = vmatmul.bf16.gmra.mxu0 %v754
    %v1092 = vpop.f32.mrf.mxu0
    %v1093 = vadd.f32 %v1080, %v1092
    %v1094 = vpop.f32.mrf.mxu0
    %1095 = vdwg.mxu0
    %1096 = vmatpush.bf16.msra.mxu0 %v1021
    %1097 = vmatpush.bf16.msra.mxu0 %v1019
    %1098 = vmatpush.bf16.msra.mxu0 %v1017
    %1099 = vmatpush.bf16.msra.mxu0 %v1015
    %1100 = vmatpush.bf16.msra.mxu0 %v1013
    %1101 = vmatpush.bf16.msra.mxu0 %v1011
    %1102 = vmatpush.bf16.msra.mxu0 %v1009
    %1103 = vmatpush.bf16.msra.mxu0 %v1007
    %1104 = vmatmul.bf16.gmra.mxu0 %v753
    %v1105 = vpop.f32.mrf.mxu0
    %v1106 = vadd.f32 %v907, %v1105
    %v1107 = vpop.f32.mrf.mxu0
    %1108 = vdwg.mxu0
    %1109 = vmatpush.bf16.msra.mxu0 %v1037
    %1110 = vmatpush.bf16.msra.mxu0 %v1035
    %1111 = vmatpush.bf16.msra.mxu0 %v1033
    %1112 = vmatpush.bf16.msra.mxu0 %v1031
    %1113 = vmatpush.bf16.msra.mxu0 %v1029
    %1114 = vmatpush.bf16.msra.mxu0 %v1027
    %1115 = vmatpush.bf16.msra.mxu0 %v1025
    %1116 = vmatpush.bf16.msra.mxu0 %v1023
    %1117 = vmatmul.bf16.gmra.mxu0 %v754
    %v1118 = vpop.f32.mrf.mxu0
    %v1119 = vadd.f32 %v1106, %v1118
    %v1120 = vpop.f32.mrf.mxu0
    %1121 = vdwg.mxu0
    %s1122 = scalar_lea.vmem [#allocation7], 4
    %v1123 = vld [vmem:[%s1122] sm:$0x3]
    %v1125 = vperm.slane %v1123, 0
    %v1126 = vperm.slane %v1123, 1
    %v1129 = vadd.f32 %v1093, %v1125
    %v1130 = vadd.f32 %v1119, %v1126
    %vm1131 = vcmp.ge.f32.partialorder %v1129, 0.0
    %vm1132 = vcmp.ge.f32.partialorder %v1130, 0.0
    %v1133 = vmul.f32 %v1129, 0.01
    %v1134 = vmul.f32 %v1130, 0.01
    %v1135 = vsel %vm1131, %v1129, %v1133
    %v1136 = vsel %vm1132, %v1130, %v1134
    %v1137 = vpack.c.bf16 %v1135, %v1135
    %v1138 = vpack.c.bf16 %v1136, %v1136
    %s1139 = scalar_lea.vmem [#allocation6], 768
    %v1140 = vld [vmem:[%s1139] sm:$0xff]
    %v1141 = vld [vmem:[%s1139 + $0x8] sm:$0xff]
    %v1142 = vld [vmem:[%s1139 + $0x10] sm:$0xff]
    %v1143 = vld [vmem:[%s1139 + $0x18] sm:$0xff]
    %v1144 = vld [vmem:[%s1139 + $0x20] sm:$0xff]
    %v1145 = vld [vmem:[%s1139 + $0x28] sm:$0xff]
    %v1146 = vld [vmem:[%s1139 + $0x30] sm:$0xff]
    %v1147 = vld [vmem:[%s1139 + $0x38] sm:$0xff]
    %v1148 = vld [vmem:[%s1139 + $0x40] sm:$0xff]
    %v1149 = vld [vmem:[%s1139 + $0x48] sm:$0xff]
    %v1150 = vld [vmem:[%s1139 + $0x50] sm:$0xff]
    %v1151 = vld [vmem:[%s1139 + $0x58] sm:$0xff]
    %v1152 = vld [vmem:[%s1139 + $0x60] sm:$0xff]
    %v1153 = vld [vmem:[%s1139 + $0x68] sm:$0xff]
    %v1154 = vld [vmem:[%s1139 + $0x70] sm:$0xff]
    %v1155 = vld [vmem:[%s1139 + $0x78] sm:$0xff]
    %v1156 = vld [vmem:[%s1139 + $0x80] sm:$0xff]
    %v1157 = vld [vmem:[%s1139 + $0x88] sm:$0xff]
    %v1158 = vld [vmem:[%s1139 + $0x90] sm:$0xff]
    %v1159 = vld [vmem:[%s1139 + $0x98] sm:$0xff]
    %v1160 = vld [vmem:[%s1139 + $0xa0] sm:$0xff]
    %v1161 = vld [vmem:[%s1139 + $0xa8] sm:$0xff]
    %v1162 = vld [vmem:[%s1139 + $0xb0] sm:$0xff]
    %v1163 = vld [vmem:[%s1139 + $0xb8] sm:$0xff]
    %v1164 = vld [vmem:[%s1139 + $0xc0] sm:$0xff]
    %v1165 = vld [vmem:[%s1139 + $0xc8] sm:$0xff]
    %v1166 = vld [vmem:[%s1139 + $0xd0] sm:$0xff]
    %v1167 = vld [vmem:[%s1139 + $0xd8] sm:$0xff]
    %v1168 = vld [vmem:[%s1139 + $0xe0] sm:$0xff]
    %v1169 = vld [vmem:[%s1139 + $0xe8] sm:$0xff]
    %v1170 = vld [vmem:[%s1139 + $0xf0] sm:$0xff]
    %v1171 = vld [vmem:[%s1139 + $0xf8] sm:$0xff]
    %s1172 = scalar_lea.vmem [#allocation7], 6
    %v1173 = vld [vmem:[%s1172] sm:$0x3]
    %v1175 = vperm.slane %v1173, 0
    %v1176 = vperm.slane %v1173, 1
    %v1211 = vunpack.c.l.b16 %v1140
    %v1212 = vunpack.c.h.b16 %v1140
    %v1213 = vunpack.c.l.b16 %v1141
    %v1214 = vunpack.c.h.b16 %v1141
    %v1215 = vunpack.c.l.b16 %v1142
    %v1216 = vunpack.c.h.b16 %v1142
    %v1217 = vunpack.c.l.b16 %v1143
    %v1218 = vunpack.c.h.b16 %v1143
    %v1219 = vunpack.c.l.b16 %v1144
    %v1220 = vunpack.c.h.b16 %v1144
    %v1221 = vunpack.c.l.b16 %v1145
    %v1222 = vunpack.c.h.b16 %v1145
    %v1223 = vunpack.c.l.b16 %v1146
    %v1224 = vunpack.c.h.b16 %v1146
    %v1225 = vunpack.c.l.b16 %v1147
    %v1226 = vunpack.c.h.b16 %v1147
    %v1227 = vunpack.c.l.b16 %v1148
    %v1228 = vunpack.c.h.b16 %v1148
    %v1229 = vunpack.c.l.b16 %v1149
    %v1230 = vunpack.c.h.b16 %v1149
    %v1231 = vunpack.c.l.b16 %v1150
    %v1232 = vunpack.c.h.b16 %v1150
    %v1233 = vunpack.c.l.b16 %v1151
    %v1234 = vunpack.c.h.b16 %v1151
    %v1235 = vunpack.c.l.b16 %v1152
    %v1236 = vunpack.c.h.b16 %v1152
    %v1237 = vunpack.c.l.b16 %v1153
    %v1238 = vunpack.c.h.b16 %v1153
    %v1239 = vunpack.c.l.b16 %v1154
    %v1240 = vunpack.c.h.b16 %v1154
    %v1241 = vunpack.c.l.b16 %v1155
    %v1242 = vunpack.c.h.b16 %v1155
    %v1243 = vunpack.c.l.b16 %v1156
    %v1244 = vunpack.c.h.b16 %v1156
    %v1245 = vunpack.c.l.b16 %v1157
    %v1246 = vunpack.c.h.b16 %v1157
    %v1247 = vunpack.c.l.b16 %v1158
    %v1248 = vunpack.c.h.b16 %v1158
    %v1249 = vunpack.c.l.b16 %v1159
    %v1250 = vunpack.c.h.b16 %v1159
    %v1251 = vunpack.c.l.b16 %v1160
    %v1252 = vunpack.c.h.b16 %v1160
    %v1253 = vunpack.c.l.b16 %v1161
    %v1254 = vunpack.c.h.b16 %v1161
    %v1255 = vunpack.c.l.b16 %v1162
    %v1256 = vunpack.c.h.b16 %v1162
    %v1257 = vunpack.c.l.b16 %v1163
    %v1258 = vunpack.c.h.b16 %v1163
    %v1259 = vunpack.c.l.b16 %v1164
    %v1260 = vunpack.c.h.b16 %v1164
    %v1261 = vunpack.c.l.b16 %v1165
    %v1262 = vunpack.c.h.b16 %v1165
    %v1263 = vunpack.c.l.b16 %v1166
    %v1264 = vunpack.c.h.b16 %v1166
    %v1265 = vunpack.c.l.b16 %v1167
    %v1266 = vunpack.c.h.b16 %v1167
    %v1267 = vunpack.c.l.b16 %v1168
    %v1268 = vunpack.c.h.b16 %v1168
    %v1269 = vunpack.c.l.b16 %v1169
    %v1270 = vunpack.c.h.b16 %v1169
    %v1271 = vunpack.c.l.b16 %v1170
    %v1272 = vunpack.c.h.b16 %v1170
    %v1273 = vunpack.c.l.b16 %v1171
    %v1274 = vunpack.c.h.b16 %v1171
    %v1275 = vpack.c.b16 %v1213, %v1211
    %v1276 = vpack.c.b16 %v1214, %v1212
    %v1277 = vpack.c.b16 %v1217, %v1215
    %v1278 = vpack.c.b16 %v1218, %v1216
    %v1279 = vpack.c.b16 %v1221, %v1219
    %v1280 = vpack.c.b16 %v1222, %v1220
    %v1281 = vpack.c.b16 %v1225, %v1223
    %v1282 = vpack.c.b16 %v1226, %v1224
    %v1283 = vpack.c.b16 %v1229, %v1227
    %v1284 = vpack.c.b16 %v1230, %v1228
    %v1285 = vpack.c.b16 %v1233, %v1231
    %v1286 = vpack.c.b16 %v1234, %v1232
    %v1287 = vpack.c.b16 %v1237, %v1235
    %v1288 = vpack.c.b16 %v1238, %v1236
    %v1289 = vpack.c.b16 %v1241, %v1239
    %v1290 = vpack.c.b16 %v1242, %v1240
    %v1291 = vpack.c.b16 %v1245, %v1243
    %v1292 = vpack.c.b16 %v1246, %v1244
    %v1293 = vpack.c.b16 %v1249, %v1247
    %v1294 = vpack.c.b16 %v1250, %v1248
    %v1295 = vpack.c.b16 %v1253, %v1251
    %v1296 = vpack.c.b16 %v1254, %v1252
    %v1297 = vpack.c.b16 %v1257, %v1255
    %v1298 = vpack.c.b16 %v1258, %v1256
    %v1299 = vpack.c.b16 %v1261, %v1259
    %v1300 = vpack.c.b16 %v1262, %v1260
    %v1301 = vpack.c.b16 %v1265, %v1263
    %v1302 = vpack.c.b16 %v1266, %v1264
    %v1303 = vpack.c.b16 %v1269, %v1267
    %v1304 = vpack.c.b16 %v1270, %v1268
    %v1305 = vpack.c.b16 %v1273, %v1271
    %v1306 = vpack.c.b16 %v1274, %v1272
    %1339 = vmatpush.bf16.msra.mxu0 %v1289
    %1340 = vmatpush.bf16.msra.mxu0 %v1287
    %1341 = vmatpush.bf16.msra.mxu0 %v1285
    %1342 = vmatpush.bf16.msra.mxu0 %v1283
    %1343 = vmatpush.bf16.msra.mxu0 %v1281
    %1344 = vmatpush.bf16.msra.mxu0 %v1279
    %1345 = vmatpush.bf16.msra.mxu0 %v1277
    %1346 = vmatpush.bf16.msra.mxu0 %v1275
    %1347 = vmatmul.bf16.gmra.mxu0 %v1137
    %v1348 = vpop.f32.mrf.mxu0
    %v1349 = vadd.f32 %v1175, %v1348
    %v1350 = vpop.f32.mrf.mxu0
    %1351 = vdwg.mxu0
    %1352 = vmatpush.bf16.msra.mxu0 %v1305
    %1353 = vmatpush.bf16.msra.mxu0 %v1303
    %1354 = vmatpush.bf16.msra.mxu0 %v1301
    %1355 = vmatpush.bf16.msra.mxu0 %v1299
    %1356 = vmatpush.bf16.msra.mxu0 %v1297
    %1357 = vmatpush.bf16.msra.mxu0 %v1295
    %1358 = vmatpush.bf16.msra.mxu0 %v1293
    %1359 = vmatpush.bf16.msra.mxu0 %v1291
    %1360 = vmatmul.bf16.gmra.mxu0 %v1138
    %v1361 = vpop.f32.mrf.mxu0
    %v1362 = vadd.f32 %v1349, %v1361
    %v1363 = vpop.f32.mrf.mxu0
    %1364 = vdwg.mxu0
    %1365 = vmatpush.bf16.msra.mxu0 %v1290
    %1366 = vmatpush.bf16.msra.mxu0 %v1288
    %1367 = vmatpush.bf16.msra.mxu0 %v1286
    %1368 = vmatpush.bf16.msra.mxu0 %v1284
    %1369 = vmatpush.bf16.msra.mxu0 %v1282
    %1370 = vmatpush.bf16.msra.mxu0 %v1280
    %1371 = vmatpush.bf16.msra.mxu0 %v1278
    %1372 = vmatpush.bf16.msra.mxu0 %v1276
    %1373 = vmatmul.bf16.gmra.mxu0 %v1137
    %v1374 = vpop.f32.mrf.mxu0
    %v1375 = vadd.f32 %v1176, %v1374
    %v1376 = vpop.f32.mrf.mxu0
    %1377 = vdwg.mxu0
    %1378 = vmatpush.bf16.msra.mxu0 %v1306
    %1379 = vmatpush.bf16.msra.mxu0 %v1304
    %1380 = vmatpush.bf16.msra.mxu0 %v1302
    %1381 = vmatpush.bf16.msra.mxu0 %v1300
    %1382 = vmatpush.bf16.msra.mxu0 %v1298
    %1383 = vmatpush.bf16.msra.mxu0 %v1296
    %1384 = vmatpush.bf16.msra.mxu0 %v1294
    %1385 = vmatpush.bf16.msra.mxu0 %v1292
    %1386 = vmatmul.bf16.gmra.mxu0 %v1138
    %v1387 = vpop.f32.mrf.mxu0
    %v1388 = vadd.f32 %v1375, %v1387
    %v1389 = vpop.f32.mrf.mxu0
    %1390 = vdwg.mxu0
    %vm1391 = vcmp.ge.f32.partialorder %v1362, 0.0
    %vm1392 = vcmp.ge.f32.partialorder %v1388, 0.0
    %v1393 = vmul.f32 %v1362, 0.01
    %v1394 = vmul.f32 %v1388, 0.01
    %v1395 = vsel %vm1391, %v1362, %v1393
    %v1396 = vsel %vm1392, %v1388, %v1394
    %v1397 = vpack.c.bf16 %v1395, %v1395
    %v1398 = vpack.c.bf16 %v1396, %v1396
    %s1399 = scalar_lea.vmem [#allocation6], 1024
    %v1400 = vld [vmem:[%s1399] sm:$0xff]
    %v1401 = vld [vmem:[%s1399 + $0x8] sm:$0xff]
    %v1402 = vld [vmem:[%s1399 + $0x10] sm:$0xff]
    %v1403 = vld [vmem:[%s1399 + $0x18] sm:$0xff]
    %v1404 = vld [vmem:[%s1399 + $0x20] sm:$0xff]
    %v1405 = vld [vmem:[%s1399 + $0x28] sm:$0xff]
    %v1406 = vld [vmem:[%s1399 + $0x30] sm:$0xff]
    %v1407 = vld [vmem:[%s1399 + $0x38] sm:$0xff]
    %v1408 = vld [vmem:[%s1399 + $0x40] sm:$0xff]
    %v1409 = vld [vmem:[%s1399 + $0x48] sm:$0xff]
    %v1410 = vld [vmem:[%s1399 + $0x50] sm:$0xff]
    %v1411 = vld [vmem:[%s1399 + $0x58] sm:$0xff]
    %v1412 = vld [vmem:[%s1399 + $0x60] sm:$0xff]
    %v1413 = vld [vmem:[%s1399 + $0x68] sm:$0xff]
    %v1414 = vld [vmem:[%s1399 + $0x70] sm:$0xff]
    %v1415 = vld [vmem:[%s1399 + $0x78] sm:$0xff]
    %v1416 = vld [vmem:[%s1399 + $0x80] sm:$0xff]
    %v1417 = vld [vmem:[%s1399 + $0x88] sm:$0xff]
    %v1418 = vld [vmem:[%s1399 + $0x90] sm:$0xff]
    %v1419 = vld [vmem:[%s1399 + $0x98] sm:$0xff]
    %v1420 = vld [vmem:[%s1399 + $0xa0] sm:$0xff]
    %v1421 = vld [vmem:[%s1399 + $0xa8] sm:$0xff]
    %v1422 = vld [vmem:[%s1399 + $0xb0] sm:$0xff]
    %v1423 = vld [vmem:[%s1399 + $0xb8] sm:$0xff]
    %v1424 = vld [vmem:[%s1399 + $0xc0] sm:$0xff]
    %v1425 = vld [vmem:[%s1399 + $0xc8] sm:$0xff]
    %v1426 = vld [vmem:[%s1399 + $0xd0] sm:$0xff]
    %v1427 = vld [vmem:[%s1399 + $0xd8] sm:$0xff]
    %v1428 = vld [vmem:[%s1399 + $0xe0] sm:$0xff]
    %v1429 = vld [vmem:[%s1399 + $0xe8] sm:$0xff]
    %v1430 = vld [vmem:[%s1399 + $0xf0] sm:$0xff]
    %v1431 = vld [vmem:[%s1399 + $0xf8] sm:$0xff]
    %s1432 = scalar_lea.vmem [#allocation7], 8
    %v1433 = vld [vmem:[%s1432] sm:$0x3]
    %v1435 = vperm.slane %v1433, 0
    %v1436 = vperm.slane %v1433, 1
    %v1471 = vunpack.c.l.b16 %v1400
    %v1472 = vunpack.c.h.b16 %v1400
    %v1473 = vunpack.c.l.b16 %v1401
    %v1474 = vunpack.c.h.b16 %v1401
    %v1475 = vunpack.c.l.b16 %v1402
    %v1476 = vunpack.c.h.b16 %v1402
    %v1477 = vunpack.c.l.b16 %v1403
    %v1478 = vunpack.c.h.b16 %v1403
    %v1479 = vunpack.c.l.b16 %v1404
    %v1480 = vunpack.c.h.b16 %v1404
    %v1481 = vunpack.c.l.b16 %v1405
    %v1482 = vunpack.c.h.b16 %v1405
    %v1483 = vunpack.c.l.b16 %v1406
    %v1484 = vunpack.c.h.b16 %v1406
    %v1485 = vunpack.c.l.b16 %v1407
    %v1486 = vunpack.c.h.b16 %v1407
    %v1487 = vunpack.c.l.b16 %v1408
    %v1488 = vunpack.c.h.b16 %v1408
    %v1489 = vunpack.c.l.b16 %v1409
    %v1490 = vunpack.c.h.b16 %v1409
    %v1491 = vunpack.c.l.b16 %v1410
    %v1492 = vunpack.c.h.b16 %v1410
    %v1493 = vunpack.c.l.b16 %v1411
    %v1494 = vunpack.c.h.b16 %v1411
    %v1495 = vunpack.c.l.b16 %v1412
    %v1496 = vunpack.c.h.b16 %v1412
    %v1497 = vunpack.c.l.b16 %v1413
    %v1498 = vunpack.c.h.b16 %v1413
    %v1499 = vunpack.c.l.b16 %v1414
    %v1500 = vunpack.c.h.b16 %v1414
    %v1501 = vunpack.c.l.b16 %v1415
    %v1502 = vunpack.c.h.b16 %v1415
    %v1503 = vunpack.c.l.b16 %v1416
    %v1504 = vunpack.c.h.b16 %v1416
    %v1505 = vunpack.c.l.b16 %v1417
    %v1506 = vunpack.c.h.b16 %v1417
    %v1507 = vunpack.c.l.b16 %v1418
    %v1508 = vunpack.c.h.b16 %v1418
    %v1509 = vunpack.c.l.b16 %v1419
    %v1510 = vunpack.c.h.b16 %v1419
    %v1511 = vunpack.c.l.b16 %v1420
    %v1512 = vunpack.c.h.b16 %v1420
    %v1513 = vunpack.c.l.b16 %v1421
    %v1514 = vunpack.c.h.b16 %v1421
    %v1515 = vunpack.c.l.b16 %v1422
    %v1516 = vunpack.c.h.b16 %v1422
    %v1517 = vunpack.c.l.b16 %v1423
    %v1518 = vunpack.c.h.b16 %v1423
    %v1519 = vunpack.c.l.b16 %v1424
    %v1520 = vunpack.c.h.b16 %v1424
    %v1521 = vunpack.c.l.b16 %v1425
    %v1522 = vunpack.c.h.b16 %v1425
    %v1523 = vunpack.c.l.b16 %v1426
    %v1524 = vunpack.c.h.b16 %v1426
    %v1525 = vunpack.c.l.b16 %v1427
    %v1526 = vunpack.c.h.b16 %v1427
    %v1527 = vunpack.c.l.b16 %v1428
    %v1528 = vunpack.c.h.b16 %v1428
    %v1529 = vunpack.c.l.b16 %v1429
    %v1530 = vunpack.c.h.b16 %v1429
    %v1531 = vunpack.c.l.b16 %v1430
    %v1532 = vunpack.c.h.b16 %v1430
    %v1533 = vunpack.c.l.b16 %v1431
    %v1534 = vunpack.c.h.b16 %v1431
    %v1535 = vpack.c.b16 %v1473, %v1471
    %v1536 = vpack.c.b16 %v1474, %v1472
    %v1537 = vpack.c.b16 %v1477, %v1475
    %v1538 = vpack.c.b16 %v1478, %v1476
    %v1539 = vpack.c.b16 %v1481, %v1479
    %v1540 = vpack.c.b16 %v1482, %v1480
    %v1541 = vpack.c.b16 %v1485, %v1483
    %v1542 = vpack.c.b16 %v1486, %v1484
    %v1543 = vpack.c.b16 %v1489, %v1487
    %v1544 = vpack.c.b16 %v1490, %v1488
    %v1545 = vpack.c.b16 %v1493, %v1491
    %v1546 = vpack.c.b16 %v1494, %v1492
    %v1547 = vpack.c.b16 %v1497, %v1495
    %v1548 = vpack.c.b16 %v1498, %v1496
    %v1549 = vpack.c.b16 %v1501, %v1499
    %v1550 = vpack.c.b16 %v1502, %v1500
    %v1551 = vpack.c.b16 %v1505, %v1503
    %v1552 = vpack.c.b16 %v1506, %v1504
    %v1553 = vpack.c.b16 %v1509, %v1507
    %v1554 = vpack.c.b16 %v1510, %v1508
    %v1555 = vpack.c.b16 %v1513, %v1511
    %v1556 = vpack.c.b16 %v1514, %v1512
    %v1557 = vpack.c.b16 %v1517, %v1515
    %v1558 = vpack.c.b16 %v1518, %v1516
    %v1559 = vpack.c.b16 %v1521, %v1519
    %v1560 = vpack.c.b16 %v1522, %v1520
    %v1561 = vpack.c.b16 %v1525, %v1523
    %v1562 = vpack.c.b16 %v1526, %v1524
    %v1563 = vpack.c.b16 %v1529, %v1527
    %v1564 = vpack.c.b16 %v1530, %v1528
    %v1565 = vpack.c.b16 %v1533, %v1531
    %v1566 = vpack.c.b16 %v1534, %v1532
    %1599 = vmatpush.bf16.msra.mxu0 %v1549
    %1600 = vmatpush.bf16.msra.mxu0 %v1547
    %1601 = vmatpush.bf16.msra.mxu0 %v1545
    %1602 = vmatpush.bf16.msra.mxu0 %v1543
    %1603 = vmatpush.bf16.msra.mxu0 %v1541
    %1604 = vmatpush.bf16.msra.mxu0 %v1539
    %1605 = vmatpush.bf16.msra.mxu0 %v1537
    %1606 = vmatpush.bf16.msra.mxu0 %v1535
    %1607 = vmatmul.bf16.gmra.mxu0 %v1397
    %v1608 = vpop.f32.mrf.mxu0
    %v1609 = vadd.f32 %v1435, %v1608
    %v1610 = vpop.f32.mrf.mxu0
    %1611 = vdwg.mxu0
    %1612 = vmatpush.bf16.msra.mxu0 %v1565
    %1613 = vmatpush.bf16.msra.mxu0 %v1563
    %1614 = vmatpush.bf16.msra.mxu0 %v1561
    %1615 = vmatpush.bf16.msra.mxu0 %v1559
    %1616 = vmatpush.bf16.msra.mxu0 %v1557
    %1617 = vmatpush.bf16.msra.mxu0 %v1555
    %1618 = vmatpush.bf16.msra.mxu0 %v1553
    %1619 = vmatpush.bf16.msra.mxu0 %v1551
    %1620 = vmatmul.bf16.gmra.mxu0 %v1398
    %v1621 = vpop.f32.mrf.mxu0
    %v1622 = vadd.f32 %v1609, %v1621
    %v1623 = vpop.f32.mrf.mxu0
    %1624 = vdwg.mxu0
    %1625 = vmatpush.bf16.msra.mxu0 %v1550
    %1626 = vmatpush.bf16.msra.mxu0 %v1548
    %1627 = vmatpush.bf16.msra.mxu0 %v1546
    %1628 = vmatpush.bf16.msra.mxu0 %v1544
    %1629 = vmatpush.bf16.msra.mxu0 %v1542
    %1630 = vmatpush.bf16.msra.mxu0 %v1540
    %1631 = vmatpush.bf16.msra.mxu0 %v1538
    %1632 = vmatpush.bf16.msra.mxu0 %v1536
    %1633 = vmatmul.bf16.gmra.mxu0 %v1397
    %v1634 = vpop.f32.mrf.mxu0
    %v1635 = vadd.f32 %v1436, %v1634
    %v1636 = vpop.f32.mrf.mxu0
    %1637 = vdwg.mxu0
    %1638 = vmatpush.bf16.msra.mxu0 %v1566
    %1639 = vmatpush.bf16.msra.mxu0 %v1564
    %1640 = vmatpush.bf16.msra.mxu0 %v1562
    %1641 = vmatpush.bf16.msra.mxu0 %v1560
    %1642 = vmatpush.bf16.msra.mxu0 %v1558
    %1643 = vmatpush.bf16.msra.mxu0 %v1556
    %1644 = vmatpush.bf16.msra.mxu0 %v1554
    %1645 = vmatpush.bf16.msra.mxu0 %v1552
    %1646 = vmatmul.bf16.gmra.mxu0 %v1398
    %v1647 = vpop.f32.mrf.mxu0
    %v1648 = vadd.f32 %v1635, %v1647
    %v1649 = vpop.f32.mrf.mxu0
    %1650 = vdwg.mxu0
    %vm1651 = vcmp.ge.f32.partialorder %v1622, 0.0
    %vm1652 = vcmp.ge.f32.partialorder %v1648, 0.0
    %v1653 = vmul.f32 %v1622, 0.01
    %v1654 = vmul.f32 %v1648, 0.01
    %v1655 = vsel %vm1651, %v1622, %v1653
    %v1656 = vsel %vm1652, %v1648, %v1654
    %v1657 = vpack.c.bf16 %v1655, %v1655
    %v1658 = vpack.c.bf16 %v1656, %v1656
    %s1659 = scalar_lea.vmem [#allocation6], 1280
    %v1660 = vld [vmem:[%s1659] sm:$0xff]
    %v1661 = vld [vmem:[%s1659 + $0x8] sm:$0xff]
    %v1662 = vld [vmem:[%s1659 + $0x10] sm:$0xff]
    %v1663 = vld [vmem:[%s1659 + $0x18] sm:$0xff]
    %v1664 = vld [vmem:[%s1659 + $0x20] sm:$0xff]
    %v1665 = vld [vmem:[%s1659 + $0x28] sm:$0xff]
    %v1666 = vld [vmem:[%s1659 + $0x30] sm:$0xff]
    %v1667 = vld [vmem:[%s1659 + $0x38] sm:$0xff]
    %v1668 = vld [vmem:[%s1659 + $0x40] sm:$0xff]
    %v1669 = vld [vmem:[%s1659 + $0x48] sm:$0xff]
    %v1670 = vld [vmem:[%s1659 + $0x50] sm:$0xff]
    %v1671 = vld [vmem:[%s1659 + $0x58] sm:$0xff]
    %v1672 = vld [vmem:[%s1659 + $0x60] sm:$0xff]
    %v1673 = vld [vmem:[%s1659 + $0x68] sm:$0xff]
    %v1674 = vld [vmem:[%s1659 + $0x70] sm:$0xff]
    %v1675 = vld [vmem:[%s1659 + $0x78] sm:$0xff]
    %v1676 = vld [vmem:[%s1659 + $0x80] sm:$0xff]
    %v1677 = vld [vmem:[%s1659 + $0x88] sm:$0xff]
    %v1678 = vld [vmem:[%s1659 + $0x90] sm:$0xff]
    %v1679 = vld [vmem:[%s1659 + $0x98] sm:$0xff]
    %v1680 = vld [vmem:[%s1659 + $0xa0] sm:$0xff]
    %v1681 = vld [vmem:[%s1659 + $0xa8] sm:$0xff]
    %v1682 = vld [vmem:[%s1659 + $0xb0] sm:$0xff]
    %v1683 = vld [vmem:[%s1659 + $0xb8] sm:$0xff]
    %v1684 = vld [vmem:[%s1659 + $0xc0] sm:$0xff]
    %v1685 = vld [vmem:[%s1659 + $0xc8] sm:$0xff]
    %v1686 = vld [vmem:[%s1659 + $0xd0] sm:$0xff]
    %v1687 = vld [vmem:[%s1659 + $0xd8] sm:$0xff]
    %v1688 = vld [vmem:[%s1659 + $0xe0] sm:$0xff]
    %v1689 = vld [vmem:[%s1659 + $0xe8] sm:$0xff]
    %v1690 = vld [vmem:[%s1659 + $0xf0] sm:$0xff]
    %v1691 = vld [vmem:[%s1659 + $0xf8] sm:$0xff]
    %s1692 = scalar_lea.vmem [#allocation7], 10
    %v1693 = vld [vmem:[%s1692] sm:$0x3]
    %v1695 = vperm.slane %v1693, 0
    %v1696 = vperm.slane %v1693, 1
    %v1731 = vunpack.c.l.b16 %v1660
    %v1732 = vunpack.c.h.b16 %v1660
    %v1733 = vunpack.c.l.b16 %v1661
    %v1734 = vunpack.c.h.b16 %v1661
    %v1735 = vunpack.c.l.b16 %v1662
    %v1736 = vunpack.c.h.b16 %v1662
    %v1737 = vunpack.c.l.b16 %v1663
    %v1738 = vunpack.c.h.b16 %v1663
    %v1739 = vunpack.c.l.b16 %v1664
    %v1740 = vunpack.c.h.b16 %v1664
    %v1741 = vunpack.c.l.b16 %v1665
    %v1742 = vunpack.c.h.b16 %v1665
    %v1743 = vunpack.c.l.b16 %v1666
    %v1744 = vunpack.c.h.b16 %v1666
    %v1745 = vunpack.c.l.b16 %v1667
    %v1746 = vunpack.c.h.b16 %v1667
    %v1747 = vunpack.c.l.b16 %v1668
    %v1748 = vunpack.c.h.b16 %v1668
    %v1749 = vunpack.c.l.b16 %v1669
    %v1750 = vunpack.c.h.b16 %v1669
    %v1751 = vunpack.c.l.b16 %v1670
    %v1752 = vunpack.c.h.b16 %v1670
    %v1753 = vunpack.c.l.b16 %v1671
    %v1754 = vunpack.c.h.b16 %v1671
    %v1755 = vunpack.c.l.b16 %v1672
    %v1756 = vunpack.c.h.b16 %v1672
    %v1757 = vunpack.c.l.b16 %v1673
    %v1758 = vunpack.c.h.b16 %v1673
    %v1759 = vunpack.c.l.b16 %v1674
    %v1760 = vunpack.c.h.b16 %v1674
    %v1761 = vunpack.c.l.b16 %v1675
    %v1762 = vunpack.c.h.b16 %v1675
    %v1763 = vunpack.c.l.b16 %v1676
    %v1764 = vunpack.c.h.b16 %v1676
    %v1765 = vunpack.c.l.b16 %v1677
    %v1766 = vunpack.c.h.b16 %v1677
    %v1767 = vunpack.c.l.b16 %v1678
    %v1768 = vunpack.c.h.b16 %v1678
    %v1769 = vunpack.c.l.b16 %v1679
    %v1770 = vunpack.c.h.b16 %v1679
    %v1771 = vunpack.c.l.b16 %v1680
    %v1772 = vunpack.c.h.b16 %v1680
    %v1773 = vunpack.c.l.b16 %v1681
    %v1774 = vunpack.c.h.b16 %v1681
    %v1775 = vunpack.c.l.b16 %v1682
    %v1776 = vunpack.c.h.b16 %v1682
    %v1777 = vunpack.c.l.b16 %v1683
    %v1778 = vunpack.c.h.b16 %v1683
    %v1779 = vunpack.c.l.b16 %v1684
    %v1780 = vunpack.c.h.b16 %v1684
    %v1781 = vunpack.c.l.b16 %v1685
    %v1782 = vunpack.c.h.b16 %v1685
    %v1783 = vunpack.c.l.b16 %v1686
    %v1784 = vunpack.c.h.b16 %v1686
    %v1785 = vunpack.c.l.b16 %v1687
    %v1786 = vunpack.c.h.b16 %v1687
    %v1787 = vunpack.c.l.b16 %v1688
    %v1788 = vunpack.c.h.b16 %v1688
    %v1789 = vunpack.c.l.b16 %v1689
    %v1790 = vunpack.c.h.b16 %v1689
    %v1791 = vunpack.c.l.b16 %v1690
    %v1792 = vunpack.c.h.b16 %v1690
    %v1793 = vunpack.c.l.b16 %v1691
    %v1794 = vunpack.c.h.b16 %v1691
    %v1795 = vpack.c.b16 %v1733, %v1731
    %v1796 = vpack.c.b16 %v1734, %v1732
    %v1797 = vpack.c.b16 %v1737, %v1735
    %v1798 = vpack.c.b16 %v1738, %v1736
    %v1799 = vpack.c.b16 %v1741, %v1739
    %v1800 = vpack.c.b16 %v1742, %v1740
    %v1801 = vpack.c.b16 %v1745, %v1743
    %v1802 = vpack.c.b16 %v1746, %v1744
    %v1803 = vpack.c.b16 %v1749, %v1747
    %v1804 = vpack.c.b16 %v1750, %v1748
    %v1805 = vpack.c.b16 %v1753, %v1751
    %v1806 = vpack.c.b16 %v1754, %v1752
    %v1807 = vpack.c.b16 %v1757, %v1755
    %v1808 = vpack.c.b16 %v1758, %v1756
    %v1809 = vpack.c.b16 %v1761, %v1759
    %v1810 = vpack.c.b16 %v1762, %v1760
    %v1811 = vpack.c.b16 %v1765, %v1763
    %v1812 = vpack.c.b16 %v1766, %v1764
    %v1813 = vpack.c.b16 %v1769, %v1767
    %v1814 = vpack.c.b16 %v1770, %v1768
    %v1815 = vpack.c.b16 %v1773, %v1771
    %v1816 = vpack.c.b16 %v1774, %v1772
    %v1817 = vpack.c.b16 %v1777, %v1775
    %v1818 = vpack.c.b16 %v1778, %v1776
    %v1819 = vpack.c.b16 %v1781, %v1779
    %v1820 = vpack.c.b16 %v1782, %v1780
    %v1821 = vpack.c.b16 %v1785, %v1783
    %v1822 = vpack.c.b16 %v1786, %v1784
    %v1823 = vpack.c.b16 %v1789, %v1787
    %v1824 = vpack.c.b16 %v1790, %v1788
    %v1825 = vpack.c.b16 %v1793, %v1791
    %v1826 = vpack.c.b16 %v1794, %v1792
    %1859 = vmatpush.bf16.msra.mxu0 %v1809
    %1860 = vmatpush.bf16.msra.mxu0 %v1807
    %1861 = vmatpush.bf16.msra.mxu0 %v1805
    %1862 = vmatpush.bf16.msra.mxu0 %v1803
    %1863 = vmatpush.bf16.msra.mxu0 %v1801
    %1864 = vmatpush.bf16.msra.mxu0 %v1799
    %1865 = vmatpush.bf16.msra.mxu0 %v1797
    %1866 = vmatpush.bf16.msra.mxu0 %v1795
    %1867 = vmatmul.bf16.gmra.mxu0 %v1657
    %v1868 = vpop.f32.mrf.mxu0
    %v1869 = vadd.f32 %v1695, %v1868
    %v1870 = vpop.f32.mrf.mxu0
    %1871 = vdwg.mxu0
    %1872 = vmatpush.bf16.msra.mxu0 %v1825
    %1873 = vmatpush.bf16.msra.mxu0 %v1823
    %1874 = vmatpush.bf16.msra.mxu0 %v1821
    %1875 = vmatpush.bf16.msra.mxu0 %v1819
    %1876 = vmatpush.bf16.msra.mxu0 %v1817
    %1877 = vmatpush.bf16.msra.mxu0 %v1815
    %1878 = vmatpush.bf16.msra.mxu0 %v1813
    %1879 = vmatpush.bf16.msra.mxu0 %v1811
    %1880 = vmatmul.bf16.gmra.mxu0 %v1658
    %v1881 = vpop.f32.mrf.mxu0
    %v1882 = vadd.f32 %v1869, %v1881
    %v1883 = vpop.f32.mrf.mxu0
    %1884 = vdwg.mxu0
    %1885 = vmatpush.bf16.msra.mxu0 %v1810
    %1886 = vmatpush.bf16.msra.mxu0 %v1808
    %1887 = vmatpush.bf16.msra.mxu0 %v1806
    %1888 = vmatpush.bf16.msra.mxu0 %v1804
    %1889 = vmatpush.bf16.msra.mxu0 %v1802
    %1890 = vmatpush.bf16.msra.mxu0 %v1800
    %1891 = vmatpush.bf16.msra.mxu0 %v1798
    %1892 = vmatpush.bf16.msra.mxu0 %v1796
    %1893 = vmatmul.bf16.gmra.mxu0 %v1657
    %v1894 = vpop.f32.mrf.mxu0
    %v1895 = vadd.f32 %v1696, %v1894
    %v1896 = vpop.f32.mrf.mxu0
    %1897 = vdwg.mxu0
    %1898 = vmatpush.bf16.msra.mxu0 %v1826
    %1899 = vmatpush.bf16.msra.mxu0 %v1824
    %1900 = vmatpush.bf16.msra.mxu0 %v1822
    %1901 = vmatpush.bf16.msra.mxu0 %v1820
    %1902 = vmatpush.bf16.msra.mxu0 %v1818
    %1903 = vmatpush.bf16.msra.mxu0 %v1816
    %1904 = vmatpush.bf16.msra.mxu0 %v1814
    %1905 = vmatpush.bf16.msra.mxu0 %v1812
    %1906 = vmatmul.bf16.gmra.mxu0 %v1658
    %v1907 = vpop.f32.mrf.mxu0
    %v1908 = vadd.f32 %v1895, %v1907
    %v1909 = vpop.f32.mrf.mxu0
    %1910 = vdwg.mxu0
    %1911 = vst [vmem:[%s6] sm:$0xff] %v1882
    %1912 = vst [vmem:[%s6 + $0x8] sm:$0xff] %v1908
    // Predicated region
    $region46: #{dis_decoder_linear_forward.2} parent=1 // pred_check
      _
    $region47: #{dis_decoder_linear_forward.2} parent=1 // pred_check_branch
      %1914 = sbr.rel (0) target = $region49
    $region48: #{dis_decoder_linear_forward.2} parent=1 // pred_region
      _
    $region49: #{dis_decoder_linear_forward.2} parent=1 // pred_fallthru
      _
    // Predicated region
    $region50: #{dis_decoder_linear_forward.2} parent=1 // pred_check
      _
    $region51: #{dis_decoder_linear_forward.2} parent=1 // pred_check_branch
      %1916 = sbr.rel (0) target = $region53
    $region52: #{dis_decoder_linear_forward.2} parent=1 // pred_region
      _
    $region53: #{dis_decoder_linear_forward.2} parent=1 // pred_fallthru
      _
    %1917 = vsyncpa [#allocation3], 1
    %1918 = vsyncpa [#allocation5], 1
    %1919 = vsyncpa [#allocation8], 1

</llo_original>
